<compile_context>
chip_gen: v7x
topology: tpu7x:2x2x1
jax: 0.10.0
libtpu: 0.0.40
codegen_flags: <defaults>
</compile_context>

<pallas_src>
import jax
import jax.numpy as jnp
from jax.experimental import pallas as pl
from jax.experimental.pallas import tpu as pltpu


LANE = 128


def _round_up(n, m):
    return ((n + m - 1) // m) * m


def _net_kernel(
    x_ref,
    w1_ref, b1_ref,
    w2_ref, b2_ref,
    w3_ref, b3_ref,
    w4_ref, b4_ref,
    w5_ref, b5_ref,
    w6_ref, b6_ref,
    w7_ref, b7_ref,
    o_ref,
):
    def linear(h, w_ref, b_ref):
        # bf16 x bf16 MXU matmul with f32 accumulation, f32 bias broadcast.
        return (
            jnp.dot(h.astype(jnp.bfloat16), w_ref[...],
                    preferred_element_type=jnp.float32)
            + b_ref[...]
        )

    def relu(z):
        return jnp.maximum(z, 0.0)  # f32 elementwise (safe on v5e too)

    x = x_ref[...].astype(jnp.float32)

    h1 = relu(linear(x, w1_ref, b1_ref))          # [TB, 256]
    y = h1
    h2 = relu(linear(h1, w2_ref, b2_ref))         # [TB, 128]
    h3 = relu(linear(h2, w3_ref, b3_ref))         # [TB, 256]
    h4 = relu(linear(h3 + y, w2_ref, b2_ref))     # fc2 reused, [TB, 128]
    h5 = relu(linear(h4, w4_ref, b4_ref))         # [TB, 128]  (64 real + zero pad)
    h6 = relu(linear(h5, w5_ref, b5_ref))         # [TB, 128]  (32 real + zero pad)
    h7 = relu(linear(h6, w6_ref, b6_ref))         # [TB, 128]  ( 4 real + zero pad)
    out = linear(h7, w7_ref, b7_ref)              # [TB, 128]  (C  real + zero pad)

    o_ref[...] = out.astype(o_ref.dtype)


def _prepare_params(params):
    """Pad every weight/bias up to 128-lane multiples (zeros), cast weights to bf16.

    Padding with zeros is exact: padded output columns get weight-col 0 and
    bias 0, so they stay 0 through relu, and the matching zero rows of the next
    layer's weight contribute nothing.
    """
    names = ("fc1", "fc2", "fc3", "fc4", "fc5", "fc6", "fc7")
    flat = []
    for idx, name in enumerate(names):
        w, b = params[name]
        fi, fo = w.shape
        fi_p = fi if idx == 0 else _round_up(fi, LANE)   # keep raw input-feature dim
        fo_p = _round_up(fo, LANE)
        w_p = jnp.zeros((fi_p, fo_p), jnp.float32).at[:fi, :fo].set(w)
        b_p = jnp.zeros((1, fo_p), jnp.float32).at[0, :fo].set(b)
        flat.append(w_p.astype(jnp.bfloat16))  # bf16 weights, f32 accumulation
        flat.append(b_p)                       # f32 bias
    return flat


def net_forward(x, params, *, batch_tile=256):
    """x: [B, in_features] float32. params: dict name -> (w [in,out], b [out])."""
    B, F = x.shape
    num_classes = params["fc7"][0].shape[1]

    flat = _prepare_params(params)
    out_pad = flat[-1].shape[1]  # padded fc7 output width (multiple of 128)

    # Pad batch to a multiple of the tile; padded rows are sliced off at the end.
    Bp = _round_up(B, batch_tile)
    if Bp != B:
        x = jnp.pad(x, ((0, Bp - B), (0, 0)))

    grid = (Bp // batch_tile,)

    def full_spec(arr):
        # Constant block index -> Pallas DMAs the (small) weights once and keeps
        # them resident across grid steps.
        return pl.BlockSpec(arr.shape, lambda i: (0, 0))

    in_specs = [pl.BlockSpec((batch_tile, F), lambda i: (i, 0))]
    in_specs += [full_spec(a) for a in flat]
    out_spec = pl.BlockSpec((batch_tile, out_pad), lambda i: (i, 0))

    # Advisory cost estimate for the XLA scheduler.
    per_row_flops = 0
    for k in range(0, len(flat), 2):
        w = flat[k]
        per_row_flops += 2 * w.shape[0] * w.shape[1]
    per_row_flops += 2 * flat[2].shape[0] * flat[2].shape[1]  # fc2 used twice
    flops = int(Bp * per_row_flops)
    bytes_accessed = int(
        x.size * x.dtype.itemsize
        + Bp * out_pad * 4
        + sum(int(a.size) * a.dtype.itemsize for a in flat)
    )

    out = pl.pallas_call(
        _net_kernel,
        out_shape=jax.ShapeDtypeStruct((Bp, out_pad), jnp.float32),
        grid_spec=pltpu.PrefetchScalarGridSpec(
            num_scalar_prefetch=0,
            grid=grid,
            in_specs=in_specs,
            out_specs=out_spec,
        ),
        compiler_params=pltpu.CompilerParams(
            # Batch axis is embarrassingly parallel -> megacore sharding on v7x.
            dimension_semantics=("parallel",),
            # Default scoped VMEM is ample for tiles <= 512; raise
            # vmem_limit_bytes here if batch_tile is pushed past ~1024.
        ),
        cost_estimate=pl.CostEstimate(
            flops=flops, transcendentals=0, bytes_accessed=bytes_accessed
        ),
    )(x, *flat)

    # Strip batch padding and lane padding (real logits only).
    return out[:B, :num_classes]


def init_params(key, in_features, num_classes):
    """Deterministic init mimicking nn.Linear's uniform(-1/sqrt(fan_in), 1/sqrt(fan_in))."""
    dims = [
        ("fc1", in_features, 256),
        ("fc2", 256, 128),
        ("fc3", 128, 256),
        ("fc4", 128, 64),
        ("fc5", 64, 32),
        ("fc6", 32, 4),
        ("fc7", 4, num_classes),
    ]
    params = {}
    for name, fan_in, fan_out in dims:
        key, kw, kb = jax.random.split(key, 3)
        bound = 1.0 / (fan_in ** 0.5)
        w = jax.random.uniform(kw, (fan_in, fan_out), jnp.float32, -bound, bound)
        b = jax.random.uniform(kb, (fan_out,), jnp.float32, -bound, bound)
        params[name] = (w, b)
    return params


def net_reference(x, params):
    """Pure-JAX reference with matching precision (bf16 matmul inputs, f32 accum)."""
    def lin(h, name):
        w, b = params[name]
        return jnp.dot(h.astype(jnp.bfloat16), w.astype(jnp.bfloat16),
                       preferred_element_type=jnp.float32) + b

    h1 = jax.nn.relu(lin(x, "fc1"))
    y = h1
    h2 = jax.nn.relu(lin(h1, "fc2"))
    h3 = jax.nn.relu(lin(h2, "fc3"))
    h4 = jax.nn.relu(lin(h3 + y, "fc2"))
    h5 = jax.nn.relu(lin(h4, "fc4"))
    h6 = jax.nn.relu(lin(h5, "fc5"))
    h7 = jax.nn.relu(lin(h6, "fc6"))
    return lin(h7, "fc7")


if __name__ == "__main__":
    key = jax.random.PRNGKey(0)

    BATCH = 64         # small demo batch; wrapper pads to the 256-row tile
    IN_FEATURES = 32   # stand-in for train_features.shape[1]
    NUM_CLASSES = 3    # stand-in for len(label_encoder.classes_)

    key, kx = jax.random.split(key)
    x = jax.random.normal(kx, (BATCH, IN_FEATURES), jnp.float32)
    params = init_params(key, IN_FEATURES, NUM_CLASSES)

    out = net_forward(x, params)
    out = jax.block_until_ready(out)

    ref = net_reference(x, params)
    assert out.shape == (BATCH, NUM_CLASSES)
    max_err = float(jnp.max(jnp.abs(out - ref)))
    assert jnp.allclose(out, ref, atol=1e-2, rtol=1e-2), f"mismatch vs reference (max err {max_err})"

    print("KERNEL_OK")
</pallas_src>

<mosaic_0001>
module attributes {stable_mosaic.version = 11 : i64} {
  func.func @_net_kernel(%arg0: i32, %arg1: memref<256x32xf32, #tpu.memory_space<vmem>>, %arg2: memref<32x256xbf16, #tpu.memory_space<vmem>>, %arg3: memref<1x256xf32, #tpu.memory_space<vmem>>, %arg4: memref<256x128xbf16, #tpu.memory_space<vmem>>, %arg5: memref<1x128xf32, #tpu.memory_space<vmem>>, %arg6: memref<128x256xbf16, #tpu.memory_space<vmem>>, %arg7: memref<1x256xf32, #tpu.memory_space<vmem>>, %arg8: memref<128x128xbf16, #tpu.memory_space<vmem>>, %arg9: memref<1x128xf32, #tpu.memory_space<vmem>>, %arg10: memref<128x128xbf16, #tpu.memory_space<vmem>>, %arg11: memref<1x128xf32, #tpu.memory_space<vmem>>, %arg12: memref<128x128xbf16, #tpu.memory_space<vmem>>, %arg13: memref<1x128xf32, #tpu.memory_space<vmem>>, %arg14: memref<128x128xbf16, #tpu.memory_space<vmem>>, %arg15: memref<1x128xf32, #tpu.memory_space<vmem>>, %arg16: memref<256x128xf32, #tpu.memory_space<vmem>>) attributes {dimension_semantics = [#tpu.dimension_semantics<parallel>], iteration_bounds = array<i64: 1>, scalar_prefetch = 0 : i64, scratch_operands = 0 : i64, tpu.core_type = #tpu.core_type<tc>, window_params = [{transform_indices = @transform_0, window_bounds = array<i64: 256, 32>}, {pipeline_mode = #tpu.pipeline_mode<synchronous>, transform_indices = @transform_1, window_bounds = array<i64: 32, 256>}, {pipeline_mode = #tpu.pipeline_mode<synchronous>, transform_indices = @transform_2, window_bounds = array<i64: 1, 256>}, {pipeline_mode = #tpu.pipeline_mode<synchronous>, transform_indices = @transform_3, window_bounds = array<i64: 256, 128>}, {pipeline_mode = #tpu.pipeline_mode<synchronous>, transform_indices = @transform_4, window_bounds = array<i64: 1, 128>}, {pipeline_mode = #tpu.pipeline_mode<synchronous>, transform_indices = @transform_5, window_bounds = array<i64: 128, 256>}, {pipeline_mode = #tpu.pipeline_mode<synchronous>, transform_indices = @transform_6, window_bounds = array<i64: 1, 256>}, {pipeline_mode = #tpu.pipeline_mode<synchronous>, transform_indices = @transform_7, window_bounds = array<i64: 128, 128>}, {pipeline_mode = #tpu.pipeline_mode<synchronous>, transform_indices = @transform_8, window_bounds = array<i64: 1, 128>}, {pipeline_mode = #tpu.pipeline_mode<synchronous>, transform_indices = @transform_9, window_bounds = array<i64: 128, 128>}, {pipeline_mode = #tpu.pipeline_mode<synchronous>, transform_indices = @transform_10, window_bounds = array<i64: 1, 128>}, {pipeline_mode = #tpu.pipeline_mode<synchronous>, transform_indices = @transform_11, window_bounds = array<i64: 128, 128>}, {pipeline_mode = #tpu.pipeline_mode<synchronous>, transform_indices = @transform_12, window_bounds = array<i64: 1, 128>}, {pipeline_mode = #tpu.pipeline_mode<synchronous>, transform_indices = @transform_13, window_bounds = array<i64: 128, 128>}, {pipeline_mode = #tpu.pipeline_mode<synchronous>, transform_indices = @transform_14, window_bounds = array<i64: 1, 128>}, {transform_indices = @transform_15, window_bounds = array<i64: 256, 128>}]} {
    %c0 = arith.constant 0 : index
    %c0_0 = arith.constant 0 : index
    %0 = vector.load %arg1[%c0, %c0_0] : memref<256x32xf32, #tpu.memory_space<vmem>>, vector<256x32xf32>
    %1 = arith.truncf %0 : vector<256x32xf32> to vector<256x32xbf16>
    %c0_1 = arith.constant 0 : index
    %c0_2 = arith.constant 0 : index
    %2 = vector.load %arg2[%c0_1, %c0_2] : memref<32x256xbf16, #tpu.memory_space<vmem>>, vector<32x256xbf16>
    %cst = arith.constant dense<0.000000e+00> : vector<256x256xf32>
    %3 = tpu.matmul %1, %2, %cst {dimension_numbers = #tpu.dot_dimension_numbers<[1], [0], [0], [1], [0, 0, 1, 1], [], []>} : vector<256x32xbf16>, vector<32x256xbf16>, vector<256x256xf32> -> vector<256x256xf32>
    %c0_3 = arith.constant 0 : index
    %c0_4 = arith.constant 0 : index
    %4 = vector.load %arg3[%c0_3, %c0_4] : memref<1x256xf32, #tpu.memory_space<vmem>>, vector<1x256xf32>
    %5 = vector.broadcast %4 : vector<1x256xf32> to vector<256x256xf32>
    %6 = arith.addf %3, %5 : vector<256x256xf32>
    %cst_5 = arith.constant 0.000000e+00 : f32
    %7 = vector.broadcast %cst_5 : f32 to vector<256x256xf32>
    %8 = arith.maximumf %6, %7 : vector<256x256xf32>
    %9 = arith.truncf %8 : vector<256x256xf32> to vector<256x256xbf16>
    %c0_6 = arith.constant 0 : index
    %c0_7 = arith.constant 0 : index
    %10 = vector.load %arg4[%c0_6, %c0_7] : memref<256x128xbf16, #tpu.memory_space<vmem>>, vector<256x128xbf16>
    %cst_8 = arith.constant dense<0.000000e+00> : vector<256x128xf32>
    %11 = tpu.matmul %9, %10, %cst_8 {dimension_numbers = #tpu.dot_dimension_numbers<[1], [0], [0], [1], [0, 0, 1, 1], [], []>} : vector<256x256xbf16>, vector<256x128xbf16>, vector<256x128xf32> -> vector<256x128xf32>
    %c0_9 = arith.constant 0 : index
    %c0_10 = arith.constant 0 : index
    %12 = vector.load %arg5[%c0_9, %c0_10] : memref<1x128xf32, #tpu.memory_space<vmem>>, vector<1x128xf32>
    %13 = vector.broadcast %12 : vector<1x128xf32> to vector<256x128xf32>
    %14 = arith.addf %11, %13 : vector<256x128xf32>
    %cst_11 = arith.constant 0.000000e+00 : f32
    %15 = vector.broadcast %cst_11 : f32 to vector<256x128xf32>
    %16 = arith.maximumf %14, %15 : vector<256x128xf32>
    %17 = arith.truncf %16 : vector<256x128xf32> to vector<256x128xbf16>
    %c0_12 = arith.constant 0 : index
    %c0_13 = arith.constant 0 : index
    %18 = vector.load %arg6[%c0_12, %c0_13] : memref<128x256xbf16, #tpu.memory_space<vmem>>, vector<128x256xbf16>
    %cst_14 = arith.constant dense<0.000000e+00> : vector<256x256xf32>
    %19 = tpu.matmul %17, %18, %cst_14 {dimension_numbers = #tpu.dot_dimension_numbers<[1], [0], [0], [1], [0, 0, 1, 1], [], []>} : vector<256x128xbf16>, vector<128x256xbf16>, vector<256x256xf32> -> vector<256x256xf32>
    %c0_15 = arith.constant 0 : index
    %c0_16 = arith.constant 0 : index
    %20 = vector.load %arg7[%c0_15, %c0_16] : memref<1x256xf32, #tpu.memory_space<vmem>>, vector<1x256xf32>
    %21 = vector.broadcast %20 : vector<1x256xf32> to vector<256x256xf32>
    %22 = arith.addf %19, %21 : vector<256x256xf32>
    %cst_17 = arith.constant 0.000000e+00 : f32
    %23 = vector.broadcast %cst_17 : f32 to vector<256x256xf32>
    %24 = arith.maximumf %22, %23 : vector<256x256xf32>
    %25 = arith.addf %24, %8 : vector<256x256xf32>
    %26 = arith.truncf %25 : vector<256x256xf32> to vector<256x256xbf16>
    %c0_18 = arith.constant 0 : index
    %c0_19 = arith.constant 0 : index
    %27 = vector.load %arg4[%c0_18, %c0_19] : memref<256x128xbf16, #tpu.memory_space<vmem>>, vector<256x128xbf16>
    %cst_20 = arith.constant dense<0.000000e+00> : vector<256x128xf32>
    %28 = tpu.matmul %26, %27, %cst_20 {dimension_numbers = #tpu.dot_dimension_numbers<[1], [0], [0], [1], [0, 0, 1, 1], [], []>} : vector<256x256xbf16>, vector<256x128xbf16>, vector<256x128xf32> -> vector<256x128xf32>
    %c0_21 = arith.constant 0 : index
    %c0_22 = arith.constant 0 : index
    %29 = vector.load %arg5[%c0_21, %c0_22] : memref<1x128xf32, #tpu.memory_space<vmem>>, vector<1x128xf32>
    %30 = vector.broadcast %29 : vector<1x128xf32> to vector<256x128xf32>
    %31 = arith.addf %28, %30 : vector<256x128xf32>
    %cst_23 = arith.constant 0.000000e+00 : f32
    %32 = vector.broadcast %cst_23 : f32 to vector<256x128xf32>
    %33 = arith.maximumf %31, %32 : vector<256x128xf32>
    %34 = arith.truncf %33 : vector<256x128xf32> to vector<256x128xbf16>
    %c0_24 = arith.constant 0 : index
    %c0_25 = arith.constant 0 : index
    %35 = vector.load %arg8[%c0_24, %c0_25] : memref<128x128xbf16, #tpu.memory_space<vmem>>, vector<128x128xbf16>
    %cst_26 = arith.constant dense<0.000000e+00> : vector<256x128xf32>
    %36 = tpu.matmul %34, %35, %cst_26 {dimension_numbers = #tpu.dot_dimension_numbers<[1], [0], [0], [1], [0, 0, 1, 1], [], []>} : vector<256x128xbf16>, vector<128x128xbf16>, vector<256x128xf32> -> vector<256x128xf32>
    %c0_27 = arith.constant 0 : index
    %c0_28 = arith.constant 0 : index
    %37 = vector.load %arg9[%c0_27, %c0_28] : memref<1x128xf32, #tpu.memory_space<vmem>>, vector<1x128xf32>
    %38 = vector.broadcast %37 : vector<1x128xf32> to vector<256x128xf32>
    %39 = arith.addf %36, %38 : vector<256x128xf32>
    %cst_29 = arith.constant 0.000000e+00 : f32
    %40 = vector.broadcast %cst_29 : f32 to vector<256x128xf32>
    %41 = arith.maximumf %39, %40 : vector<256x128xf32>
    %42 = arith.truncf %41 : vector<256x128xf32> to vector<256x128xbf16>
    %c0_30 = arith.constant 0 : index
    %c0_31 = arith.constant 0 : index
    %43 = vector.load %arg10[%c0_30, %c0_31] : memref<128x128xbf16, #tpu.memory_space<vmem>>, vector<128x128xbf16>
    %cst_32 = arith.constant dense<0.000000e+00> : vector<256x128xf32>
    %44 = tpu.matmul %42, %43, %cst_32 {dimension_numbers = #tpu.dot_dimension_numbers<[1], [0], [0], [1], [0, 0, 1, 1], [], []>} : vector<256x128xbf16>, vector<128x128xbf16>, vector<256x128xf32> -> vector<256x128xf32>
    %c0_33 = arith.constant 0 : index
    %c0_34 = arith.constant 0 : index
    %45 = vector.load %arg11[%c0_33, %c0_34] : memref<1x128xf32, #tpu.memory_space<vmem>>, vector<1x128xf32>
    %46 = vector.broadcast %45 : vector<1x128xf32> to vector<256x128xf32>
    %47 = arith.addf %44, %46 : vector<256x128xf32>
    %cst_35 = arith.constant 0.000000e+00 : f32
    %48 = vector.broadcast %cst_35 : f32 to vector<256x128xf32>
    %49 = arith.maximumf %47, %48 : vector<256x128xf32>
    %50 = arith.truncf %49 : vector<256x128xf32> to vector<256x128xbf16>
    %c0_36 = arith.constant 0 : index
    %c0_37 = arith.constant 0 : index
    %51 = vector.load %arg12[%c0_36, %c0_37] : memref<128x128xbf16, #tpu.memory_space<vmem>>, vector<128x128xbf16>
    %cst_38 = arith.constant dense<0.000000e+00> : vector<256x128xf32>
    %52 = tpu.matmul %50, %51, %cst_38 {dimension_numbers = #tpu.dot_dimension_numbers<[1], [0], [0], [1], [0, 0, 1, 1], [], []>} : vector<256x128xbf16>, vector<128x128xbf16>, vector<256x128xf32> -> vector<256x128xf32>
    %c0_39 = arith.constant 0 : index
    %c0_40 = arith.constant 0 : index
    %53 = vector.load %arg13[%c0_39, %c0_40] : memref<1x128xf32, #tpu.memory_space<vmem>>, vector<1x128xf32>
    %54 = vector.broadcast %53 : vector<1x128xf32> to vector<256x128xf32>
    %55 = arith.addf %52, %54 : vector<256x128xf32>
    %cst_41 = arith.constant 0.000000e+00 : f32
    %56 = vector.broadcast %cst_41 : f32 to vector<256x128xf32>
    %57 = arith.maximumf %55, %56 : vector<256x128xf32>
    %58 = arith.truncf %57 : vector<256x128xf32> to vector<256x128xbf16>
    %c0_42 = arith.constant 0 : index
    %c0_43 = arith.constant 0 : index
    %59 = vector.load %arg14[%c0_42, %c0_43] : memref<128x128xbf16, #tpu.memory_space<vmem>>, vector<128x128xbf16>
    %cst_44 = arith.constant dense<0.000000e+00> : vector<256x128xf32>
    %60 = tpu.matmul %58, %59, %cst_44 {dimension_numbers = #tpu.dot_dimension_numbers<[1], [0], [0], [1], [0, 0, 1, 1], [], []>} : vector<256x128xbf16>, vector<128x128xbf16>, vector<256x128xf32> -> vector<256x128xf32>
    %c0_45 = arith.constant 0 : index
    %c0_46 = arith.constant 0 : index
    %61 = vector.load %arg15[%c0_45, %c0_46] : memref<1x128xf32, #tpu.memory_space<vmem>>, vector<1x128xf32>
    %62 = vector.broadcast %61 : vector<1x128xf32> to vector<256x128xf32>
    %63 = arith.addf %60, %62 : vector<256x128xf32>
    %c0_47 = arith.constant 0 : index
    %c0_48 = arith.constant 0 : index
    %64 = vector.load %arg16[%c0_47, %c0_48] : memref<256x128xf32, #tpu.memory_space<vmem>>, vector<256x128xf32>
    tpu.vector_store %arg16[%c0_47, %c0_48], %63 {strides = array<i32>} : memref<256x128xf32, #tpu.memory_space<vmem>>, vector<256x128xf32>,
    return
  }
  func.func @transform_0(%arg0: i32) -> (i32, i32) {
    %c0_i32 = arith.constant 0 : i32
    %c0_i32_0 = arith.constant 0 : i32
    return %arg0, %c0_i32 : i32, i32
  }
  func.func @transform_1(%arg0: i32) -> (i32, i32) {
    %c0_i32 = arith.constant 0 : i32
    %c0_i32_0 = arith.constant 0 : i32
    %c0_i32_1 = arith.constant 0 : i32
    return %c0_i32, %c0_i32_0 : i32, i32
  }
  func.func @transform_2(%arg0: i32) -> (i32, i32) {
    %c0_i32 = arith.constant 0 : i32
    %c0_i32_0 = arith.constant 0 : i32
    %c0_i32_1 = arith.constant 0 : i32
    return %c0_i32, %c0_i32_0 : i32, i32
  }
  func.func @transform_3(%arg0: i32) -> (i32, i32) {
    %c0_i32 = arith.constant 0 : i32
    %c0_i32_0 = arith.constant 0 : i32
    %c0_i32_1 = arith.constant 0 : i32
    return %c0_i32, %c0_i32_0 : i32, i32
  }
  func.func @transform_4(%arg0: i32) -> (i32, i32) {
    %c0_i32 = arith.constant 0 : i32
    %c0_i32_0 = arith.constant 0 : i32
    %c0_i32_1 = arith.constant 0 : i32
    return %c0_i32, %c0_i32_0 : i32, i32
  }
  func.func @transform_5(%arg0: i32) -> (i32, i32) {
    %c0_i32 = arith.constant 0 : i32
    %c0_i32_0 = arith.constant 0 : i32
    %c0_i32_1 = arith.constant 0 : i32
    return %c0_i32, %c0_i32_0 : i32, i32
  }
  func.func @transform_6(%arg0: i32) -> (i32, i32) {
    %c0_i32 = arith.constant 0 : i32
    %c0_i32_0 = arith.constant 0 : i32
    %c0_i32_1 = arith.constant 0 : i32
    return %c0_i32, %c0_i32_0 : i32, i32
  }
  func.func @transform_7(%arg0: i32) -> (i32, i32) {
    %c0_i32 = arith.constant 0 : i32
    %c0_i32_0 = arith.constant 0 : i32
    %c0_i32_1 = arith.constant 0 : i32
    return %c0_i32, %c0_i32_0 : i32, i32
  }
  func.func @transform_8(%arg0: i32) -> (i32, i32) {
    %c0_i32 = arith.constant 0 : i32
    %c0_i32_0 = arith.constant 0 : i32
    %c0_i32_1 = arith.constant 0 : i32
    return %c0_i32, %c0_i32_0 : i32, i32
  }
  func.func @transform_9(%arg0: i32) -> (i32, i32) {
    %c0_i32 = arith.constant 0 : i32
    %c0_i32_0 = arith.constant 0 : i32
    %c0_i32_1 = arith.constant 0 : i32
    return %c0_i32, %c0_i32_0 : i32, i32
  }
  func.func @transform_10(%arg0: i32) -> (i32, i32) {
    %c0_i32 = arith.constant 0 : i32
    %c0_i32_0 = arith.constant 0 : i32
    %c0_i32_1 = arith.constant 0 : i32
    return %c0_i32, %c0_i32_0 : i32, i32
  }
  func.func @transform_11(%arg0: i32) -> (i32, i32) {
    %c0_i32 = arith.constant 0 : i32
    %c0_i32_0 = arith.constant 0 : i32
    %c0_i32_1 = arith.constant 0 : i32
    return %c0_i32, %c0_i32_0 : i32, i32
  }
  func.func @transform_12(%arg0: i32) -> (i32, i32) {
    %c0_i32 = arith.constant 0 : i32
    %c0_i32_0 = arith.constant 0 : i32
    %c0_i32_1 = arith.constant 0 : i32
    return %c0_i32, %c0_i32_0 : i32, i32
  }
  func.func @transform_13(%arg0: i32) -> (i32, i32) {
    %c0_i32 = arith.constant 0 : i32
    %c0_i32_0 = arith.constant 0 : i32
    %c0_i32_1 = arith.constant 0 : i32
    return %c0_i32, %c0_i32_0 : i32, i32
  }
  func.func @transform_14(%arg0: i32) -> (i32, i32) {
    %c0_i32 = arith.constant 0 : i32
    %c0_i32_0 = arith.constant 0 : i32
    %c0_i32_1 = arith.constant 0 : i32
    return %c0_i32, %c0_i32_0 : i32, i32
  }
  func.func @transform_15(%arg0: i32) -> (i32, i32) {
    %c0_i32 = arith.constant 0 : i32
    %c0_i32_0 = arith.constant 0 : i32
    return %arg0, %c0_i32 : i32, i32
  }
}

</mosaic_0001>

<llo_original>
// kernel: tpu_custom_call.1
$region0: #{tpu_custom_call.1}
  #allocation0 [shape = 'u32[]', space=smem, size = 0x4, offset = 0x4, fixed_abs, tag = 'smem constant byte address 0x4 - core index']
  #allocation1 [shape = 'u32[144,128]{1,0:T(1,128)}', space=vmem, size = 0x12000, scoped, tag = 'internal scratch']
  %s0 = inlined_call_operand.vmem [shape: f32[256,32], index: 0, kind: input, shape index: {}]
  %s1 = inlined_call_operand.hbm [shape: bf16[32,256], index: 1, kind: input, shape index: {}]
  %s2 = inlined_call_operand.vmem [shape: f32[1,256], index: 2, kind: input, shape index: {}]
  %s3 = inlined_call_operand.vmem [shape: bf16[256,128], index: 3, kind: input, shape index: {}]
  %s4 = inlined_call_operand.vmem [shape: f32[1,128], index: 4, kind: input, shape index: {}]
  %s5 = inlined_call_operand.vmem [shape: bf16[128,256], index: 5, kind: input, shape index: {}]
  %s6 = inlined_call_operand.vmem [shape: f32[1,256], index: 6, kind: input, shape index: {}]
  %s7 = inlined_call_operand.vmem [shape: bf16[128,128], index: 7, kind: input, shape index: {}]
  %s8 = inlined_call_operand.vmem [shape: f32[1,128], index: 8, kind: input, shape index: {}]
  %s9 = inlined_call_operand.hbm [shape: bf16[128,128], index: 9, kind: input, shape index: {}]
  %s10 = inlined_call_operand.vmem [shape: f32[1,128], index: 10, kind: input, shape index: {}]
  %s11 = inlined_call_operand.hbm [shape: bf16[128,128], index: 11, kind: input, shape index: {}]
  %s12 = inlined_call_operand.vmem [shape: f32[1,128], index: 12, kind: input, shape index: {}]
  %s13 = inlined_call_operand.hbm [shape: bf16[128,128], index: 13, kind: input, shape index: {}]
  %s14 = inlined_call_operand.vmem [shape: f32[1,128], index: 14, kind: input, shape index: {}]
  %s15 = inlined_call_operand.hbm [shape: f32[256,128], index: 15, kind: output, shape index: {}]
  %s16 = sld [smem:[#allocation0]]
  $region86: #{tpu_custom_call.1} parent=0
    _
  %s18 = ssub.s32 1, %s16
  %s19 = scalar_select 0, %s18, %s16
  $region1: #{tpu_custom_call.1} parent=0
    #allocation2 [shape = 'u8[16384]{0}', space=vmem, size = 0x4000, scoped, tag = 'input window, operand 1, single buffered']
    #allocation3 [shape = 's32[1]{0}', space=sflag, size = 0x4, scoped, tag = 'scoped memory for tpu_custom_call.1']
    #allocation4 [shape = 's32[1]{0}', space=sflag, size = 0x4, scoped, tag = 'scoped memory for tpu_custom_call.1']
    #allocation5 [shape = 'u8[32768]{0}', space=vmem, size = 0x8000, scoped, tag = 'input window, operand 9, single buffered']
    #allocation6 [shape = 's32[1]{0}', space=sflag, size = 0x4, scoped, tag = 'scoped memory for tpu_custom_call.1']
    #allocation7 [shape = 'u8[32768]{0}', space=vmem, size = 0x8000, scoped, tag = 'input window, operand 11, single buffered']
    #allocation8 [shape = 'u8[32768]{0}', space=vmem, size = 0x8000, scoped, tag = 'input window, operand 13, single buffered']
    #allocation9 [shape = 's32[1]{0}', space=sflag, size = 0x4, scoped, tag = 'scoped memory for tpu_custom_call.1']
    #allocation10 [shape = 'u8[131072]{0}', space=vmem, size = 0x20000, scoped, tag = 'output window, operand 0, single buffered']
    %20 = vsyncpa [#allocation3], 0
    %21 = vsyncpa [#allocation6], 0
    %22 = vsyncpa [#allocation9], 0
    %23 = vsyncpa [#allocation4], 0
    // Predicated region
    $region2: #{tpu_custom_call.1} parent=1 // pred_check
      _
    $region3: #{tpu_custom_call.1} parent=1 // pred_check_branch
      %25 = sbr.rel (0) target = $region5
    $region4: #{tpu_custom_call.1} parent=1 // pred_region
      _
    $region5: #{tpu_custom_call.1} parent=1 // pred_fallthru
      _
    // Predicated region
    $region6: #{tpu_custom_call.1} parent=1 // pred_check
      _
    $region7: #{tpu_custom_call.1} parent=1 // pred_check_branch
      %27 = sbr.rel (0) target = $region9
    $region8: #{tpu_custom_call.1} parent=1 // pred_region
      %s29 = ssub.s32 512, 512
      %30 = vsyncadd [#allocation3], %s29
      %s31 = sshll.u32 [#allocation2], 4
      %s32 = int_to_ptr.vmem [resolvable:$true] %s31
      %37 = dma.hbm_to_vmem [thread:$0]  %s1, 512, %s32, [#allocation3], 128, 128, 8
    $region9: #{tpu_custom_call.1} parent=1 // pred_fallthru
      _
    // Predicated region
    $region10: #{tpu_custom_call.1} parent=1 // pred_check
      _
    $region11: #{tpu_custom_call.1} parent=1 // pred_check_branch
      %39 = sbr.rel (0) target = $region13
    $region12: #{tpu_custom_call.1} parent=1 // pred_region
      _
    $region13: #{tpu_custom_call.1} parent=1 // pred_fallthru
      _
    // Predicated region
    $region14: #{tpu_custom_call.1} parent=1 // pred_check
      _
    $region15: #{tpu_custom_call.1} parent=1 // pred_check_branch
      %41 = sbr.rel (0) target = $region17
    $region16: #{tpu_custom_call.1} parent=1 // pred_region
      _
    $region17: #{tpu_custom_call.1} parent=1 // pred_fallthru
      _
    // Predicated region
    $region18: #{tpu_custom_call.1} parent=1 // pred_check
      _
    $region19: #{tpu_custom_call.1} parent=1 // pred_check_branch
      %43 = sbr.rel (0) target = $region21
    $region20: #{tpu_custom_call.1} parent=1 // pred_region
      _
    $region21: #{tpu_custom_call.1} parent=1 // pred_fallthru
      _
    // Predicated region
    $region22: #{tpu_custom_call.1} parent=1 // pred_check
      _
    $region23: #{tpu_custom_call.1} parent=1 // pred_check_branch
      %45 = sbr.rel (0) target = $region25
    $region24: #{tpu_custom_call.1} parent=1 // pred_region
      _
    $region25: #{tpu_custom_call.1} parent=1 // pred_fallthru
      _
    // Predicated region
    $region26: #{tpu_custom_call.1} parent=1 // pred_check
      _
    $region27: #{tpu_custom_call.1} parent=1 // pred_check_branch
      %47 = sbr.rel (0) target = $region29
    $region28: #{tpu_custom_call.1} parent=1 // pred_region
      _
    $region29: #{tpu_custom_call.1} parent=1 // pred_fallthru
      _
    // Predicated region
    $region30: #{tpu_custom_call.1} parent=1 // pred_check
      _
    $region31: #{tpu_custom_call.1} parent=1 // pred_check_branch
      %49 = sbr.rel (0) target = $region33
    $region32: #{tpu_custom_call.1} parent=1 // pred_region
      _
    $region33: #{tpu_custom_call.1} parent=1 // pred_fallthru
      _
    // Predicated region
    $region34: #{tpu_custom_call.1} parent=1 // pred_check
      _
    $region35: #{tpu_custom_call.1} parent=1 // pred_check_branch
      %51 = sbr.rel (0) target = $region37
    $region36: #{tpu_custom_call.1} parent=1 // pred_region
      _
    $region37: #{tpu_custom_call.1} parent=1 // pred_fallthru
      _
    // Predicated region
    $region38: #{tpu_custom_call.1} parent=1 // pred_check
      _
    $region39: #{tpu_custom_call.1} parent=1 // pred_check_branch
      %53 = sbr.rel (0) target = $region41
    $region40: #{tpu_custom_call.1} parent=1 // pred_region
      %s55 = ssub.s32 1024, 1024
      %56 = vsyncadd [#allocation6], %s55
      %s57 = sshll.u32 [#allocation5], 4
      %s58 = int_to_ptr.vmem [resolvable:$true] %s57
      %63 = dma.hbm_to_vmem [thread:$0]  %s9, 1024, %s58, [#allocation6], 64, 64, 4
    $region41: #{tpu_custom_call.1} parent=1 // pred_fallthru
      _
    // Predicated region
    $region42: #{tpu_custom_call.1} parent=1 // pred_check
      _
    $region43: #{tpu_custom_call.1} parent=1 // pred_check_branch
      %65 = sbr.rel (0) target = $region45
    $region44: #{tpu_custom_call.1} parent=1 // pred_region
      _
    $region45: #{tpu_custom_call.1} parent=1 // pred_fallthru
      _
    // Predicated region
    $region46: #{tpu_custom_call.1} parent=1 // pred_check
      _
    $region47: #{tpu_custom_call.1} parent=1 // pred_check_branch
      %67 = sbr.rel (0) target = $region49
    $region48: #{tpu_custom_call.1} parent=1 // pred_region
      %s69 = ssub.s32 1024, 1024
      %70 = vsyncadd [#allocation6], %s69
      %s71 = sshll.u32 [#allocation7], 4
      %s72 = int_to_ptr.vmem [resolvable:$true] %s71
      %77 = dma.hbm_to_vmem [thread:$0]  %s11, 1024, %s72, [#allocation6], 64, 64, 4
    $region49: #{tpu_custom_call.1} parent=1 // pred_fallthru
      _
    // Predicated region
    $region50: #{tpu_custom_call.1} parent=1 // pred_check
      _
    $region51: #{tpu_custom_call.1} parent=1 // pred_check_branch
      %79 = sbr.rel (0) target = $region53
    $region52: #{tpu_custom_call.1} parent=1 // pred_region
      _
    $region53: #{tpu_custom_call.1} parent=1 // pred_fallthru
      _
    // Predicated region
    $region54: #{tpu_custom_call.1} parent=1 // pred_check
      _
    $region55: #{tpu_custom_call.1} parent=1 // pred_check_branch
      %81 = sbr.rel (0) target = $region57
    $region56: #{tpu_custom_call.1} parent=1 // pred_region
      %s83 = ssub.s32 1024, 1024
      %84 = vsyncadd [#allocation9], %s83
      %s85 = sshll.u32 [#allocation8], 4
      %s86 = int_to_ptr.vmem [resolvable:$true] %s85
      %91 = dma.hbm_to_vmem [thread:$0]  %s13, 1024, %s86, [#allocation9], 64, 64, 4
    $region57: #{tpu_custom_call.1} parent=1 // pred_fallthru
      _
    // Predicated region
    $region58: #{tpu_custom_call.1} parent=1 // pred_check
      _
    $region59: #{tpu_custom_call.1} parent=1 // pred_check_branch
      %93 = sbr.rel (0) target = $region61
    $region60: #{tpu_custom_call.1} parent=1 // pred_region
      _
    $region61: #{tpu_custom_call.1} parent=1 // pred_fallthru
      _
    // Predicated region
    $region62: #{tpu_custom_call.1} parent=1 // pred_check
      _
    $region63: #{tpu_custom_call.1} parent=1 // pred_check_branch
      %95 = sbr.rel (0) target = $region65
    $region64: #{tpu_custom_call.1} parent=1 // pred_region
      %96 = dma.done [#allocation3], 512
    $region65: #{tpu_custom_call.1} parent=1 // pred_fallthru
      _
    // Predicated region
    $region66: #{tpu_custom_call.1} parent=1 // pred_check
      _
    $region67: #{tpu_custom_call.1} parent=1 // pred_check_branch
      %98 = sbr.rel (0) target = $region69
    $region68: #{tpu_custom_call.1} parent=1 // pred_region
      %99 = dma.done [#allocation6], 1024
    $region69: #{tpu_custom_call.1} parent=1 // pred_fallthru
      _
    // Predicated region
    $region70: #{tpu_custom_call.1} parent=1 // pred_check
      _
    $region71: #{tpu_custom_call.1} parent=1 // pred_check_branch
      %101 = sbr.rel (0) target = $region73
    $region72: #{tpu_custom_call.1} parent=1 // pred_region
      %102 = dma.done [#allocation6], 1024
    $region73: #{tpu_custom_call.1} parent=1 // pred_fallthru
      _
    // Predicated region
    $region74: #{tpu_custom_call.1} parent=1 // pred_check
      _
    $region75: #{tpu_custom_call.1} parent=1 // pred_check_branch
      %104 = sbr.rel (0) target = $region77
    $region76: #{tpu_custom_call.1} parent=1 // pred_region
      %105 = dma.done [#allocation9], 1024
    $region77: #{tpu_custom_call.1} parent=1 // pred_fallthru
      _
    %v107 = vld [vmem:[%s0] sm:$0xff]
    %v108 = vld [vmem:[%s0 + $0x8] sm:$0xff]
    %v109 = vld [vmem:[%s0 + $0x10] sm:$0xff]
    %v110 = vld [vmem:[%s0 + $0x18] sm:$0xff]
    %v111 = vld [vmem:[%s0 + $0x20] sm:$0xff]
    %v112 = vld [vmem:[%s0 + $0x28] sm:$0xff]
    %v113 = vld [vmem:[%s0 + $0x30] sm:$0xff]
    %v114 = vld [vmem:[%s0 + $0x38] sm:$0xff]
    %v115 = vld [vmem:[%s0 + $0x40] sm:$0xff]
    %v116 = vld [vmem:[%s0 + $0x48] sm:$0xff]
    %v117 = vld [vmem:[%s0 + $0x50] sm:$0xff]
    %v118 = vld [vmem:[%s0 + $0x58] sm:$0xff]
    %v119 = vld [vmem:[%s0 + $0x60] sm:$0xff]
    %v120 = vld [vmem:[%s0 + $0x68] sm:$0xff]
    %v121 = vld [vmem:[%s0 + $0x70] sm:$0xff]
    %v122 = vld [vmem:[%s0 + $0x78] sm:$0xff]
    %v123 = vld [vmem:[%s0 + $0x80] sm:$0xff]
    %v124 = vld [vmem:[%s0 + $0x88] sm:$0xff]
    %v125 = vld [vmem:[%s0 + $0x90] sm:$0xff]
    %v126 = vld [vmem:[%s0 + $0x98] sm:$0xff]
    %v127 = vld [vmem:[%s0 + $0xa0] sm:$0xff]
    %v128 = vld [vmem:[%s0 + $0xa8] sm:$0xff]
    %v129 = vld [vmem:[%s0 + $0xb0] sm:$0xff]
    %v130 = vld [vmem:[%s0 + $0xb8] sm:$0xff]
    %v131 = vld [vmem:[%s0 + $0xc0] sm:$0xff]
    %v132 = vld [vmem:[%s0 + $0xc8] sm:$0xff]
    %v133 = vld [vmem:[%s0 + $0xd0] sm:$0xff]
    %v134 = vld [vmem:[%s0 + $0xd8] sm:$0xff]
    %v135 = vld [vmem:[%s0 + $0xe0] sm:$0xff]
    %v136 = vld [vmem:[%s0 + $0xe8] sm:$0xff]
    %v137 = vld [vmem:[%s0 + $0xf0] sm:$0xff]
    %v138 = vld [vmem:[%s0 + $0xf8] sm:$0xff]
    %v139 = vpack.c.bf16 %v108, %v107
    %v140 = vpack.c.bf16 %v110, %v109
    %v141 = vpack.c.bf16 %v112, %v111
    %v142 = vpack.c.bf16 %v114, %v113
    %v143 = vpack.c.bf16 %v116, %v115
    %v144 = vpack.c.bf16 %v118, %v117
    %v145 = vpack.c.bf16 %v120, %v119
    %v146 = vpack.c.bf16 %v122, %v121
    %v147 = vpack.c.bf16 %v124, %v123
    %v148 = vpack.c.bf16 %v126, %v125
    %v149 = vpack.c.bf16 %v128, %v127
    %v150 = vpack.c.bf16 %v130, %v129
    %v151 = vpack.c.bf16 %v132, %v131
    %v152 = vpack.c.bf16 %v134, %v133
    %v153 = vpack.c.bf16 %v136, %v135
    %v154 = vpack.c.bf16 %v138, %v137
    %v155 = vld [vmem:[#allocation2] sm:$0xff]
    %v156 = vld [vmem:[#allocation2 + $0x8] sm:$0xff]
    %v157 = vld [vmem:[#allocation2 + $0x10] sm:$0xff]
    %v158 = vld [vmem:[#allocation2 + $0x18] sm:$0xff]
    %v159 = vld [vmem:[%s2] sm:$0x3]
    %v161 = vlaneseq
    %v162 = vshrl.u32 %v161, 7
    %v163 = vsub.s32 0, %v162
    %v164 = vrot.slane %v159, %v163
    %v165 = vlaneseq
    %v166 = vshrl.u32 %v165, 7
    %v167 = vsub.s32 1, %v166
    %v168 = vrot.slane %v159, %v167
    %v175 = vunpack.c.l.b16 %v155
    %v176 = vunpack.c.h.b16 %v155
    %v177 = vunpack.c.l.b16 %v156
    %v178 = vunpack.c.h.b16 %v156
    %v179 = vunpack.c.l.b16 %v157
    %v180 = vunpack.c.h.b16 %v157
    %v181 = vunpack.c.l.b16 %v158
    %v182 = vunpack.c.h.b16 %v158
    %v183 = vpack.c.b16 %v177, %v175
    %v184 = vpack.c.b16 %v178, %v176
    %v185 = vpack.c.b16 %v181, %v179
    %v186 = vpack.c.b16 %v182, %v180
    %vm191 = vcmask 261120
    %v193 = vsel %vm191, %v139, 0
    %v196 = vsel %vm191, %v140, 0
    %v199 = vsel %vm191, %v141, 0
    %v202 = vsel %vm191, %v142, 0
    %v205 = vsel %vm191, %v143, 0
    %v208 = vsel %vm191, %v144, 0
    %v211 = vsel %vm191, %v145, 0
    %v214 = vsel %vm191, %v146, 0
    %v217 = vsel %vm191, %v147, 0
    %v220 = vsel %vm191, %v148, 0
    %v223 = vsel %vm191, %v149, 0
    %v226 = vsel %vm191, %v150, 0
    %v229 = vsel %vm191, %v151, 0
    %v232 = vsel %vm191, %v152, 0
    %v235 = vsel %vm191, %v153, 0
    %v238 = vsel %vm191, %v154, 0
    %240 = vmatprep.subr.bf16.mxu0 %v184
    %241 = vmatpush1.bf16.msra.mxu0 %v183
    %242 = vmatprep.subr.bf16.mxu0 %v186
    %243 = vmatpush1.bf16.msra.mxu0 %v185
    %244 = vmatprep.subr.bf16.mxu0 0
    %245 = vmatpush1.bf16.msra.mxu0 0
    %246 = vmatprep.subr.bf16.mxu0 0
    %247 = vmatpush1.bf16.msra.mxu0 0
    %248 = vmatprep.subr.bf16.mxu0 0
    %249 = vmatpush1.bf16.msra.mxu0 0
    %250 = vmatprep.subr.bf16.mxu0 0
    %251 = vmatpush1.bf16.msra.mxu0 0
    %252 = vmatprep.subr.bf16.mxu0 0
    %253 = vmatpush1.bf16.msra.mxu0 0
    %254 = vmatprep.subr.bf16.mxu0 0
    %255 = vmatpush1.bf16.msra.mxu0 0
    %256 = vmatprep.subr.bf16.mxu0 0
    %257 = vmatpush1.bf16.msra.mxu0 0
    %258 = vmatprep.subr.bf16.mxu0 0
    %259 = vmatpush1.bf16.msra.mxu0 0
    %260 = vmatprep.subr.bf16.mxu0 0
    %261 = vmatpush1.bf16.msra.mxu0 0
    %262 = vmatprep.subr.bf16.mxu0 0
    %263 = vmatpush1.bf16.msra.mxu0 0
    %264 = vmatprep.subr.bf16.mxu0 0
    %265 = vmatpush1.bf16.msra.mxu0 0
    %266 = vmatprep.subr.bf16.mxu0 0
    %267 = vmatpush1.bf16.msra.mxu0 0
    %268 = vmatprep.subr.bf16.mxu0 0
    %269 = vmatpush1.bf16.msra.mxu0 0
    %270 = vmatprep.subr.bf16.mxu0 0
    %271 = vmatpush1.bf16.msra.mxu0 0
    %272 = vmatprep.mubr.bf16.mxu0 0
    %273 = vmatmul.mubr.bf16.gmra.mrb[0].mxu0 %v193
    %v274 = vpop.f32.mrb[0].mxu0
    %v275 = vadd.f32 %v164, %v274
    %v276 = vpop.f32.mrb[0].mxu0
    %v277 = vadd.f32 %v168, %v276
    %v278 = vpop.f32.mrb[0].mxu0
    %v279 = vadd.f32 %v164, %v278
    %v280 = vpop.f32.mrb[0].mxu0
    %v281 = vadd.f32 %v168, %v280
    %282 = vmatprep.mubr.bf16.mxu0 0
    %283 = vmatmul.mubr.bf16.gmra.mrb[0].mxu0 %v196
    %v284 = vpop.f32.mrb[0].mxu0
    %v285 = vadd.f32 %v164, %v284
    %v286 = vpop.f32.mrb[0].mxu0
    %v287 = vadd.f32 %v168, %v286
    %v288 = vpop.f32.mrb[0].mxu0
    %v289 = vadd.f32 %v164, %v288
    %v290 = vpop.f32.mrb[0].mxu0
    %v291 = vadd.f32 %v168, %v290
    %292 = vmatprep.mubr.bf16.mxu0 0
    %293 = vmatmul.mubr.bf16.gmra.mrb[0].mxu0 %v199
    %v294 = vpop.f32.mrb[0].mxu0
    %v295 = vadd.f32 %v164, %v294
    %v296 = vpop.f32.mrb[0].mxu0
    %v297 = vadd.f32 %v168, %v296
    %v298 = vpop.f32.mrb[0].mxu0
    %v299 = vadd.f32 %v164, %v298
    %v300 = vpop.f32.mrb[0].mxu0
    %v301 = vadd.f32 %v168, %v300
    %302 = vmatprep.mubr.bf16.mxu0 0
    %303 = vmatmul.mubr.bf16.gmra.mrb[0].mxu0 %v202
    %v304 = vpop.f32.mrb[0].mxu0
    %v305 = vadd.f32 %v164, %v304
    %v306 = vpop.f32.mrb[0].mxu0
    %v307 = vadd.f32 %v168, %v306
    %v308 = vpop.f32.mrb[0].mxu0
    %v309 = vadd.f32 %v164, %v308
    %v310 = vpop.f32.mrb[0].mxu0
    %v311 = vadd.f32 %v168, %v310
    %312 = vmatprep.mubr.bf16.mxu0 0
    %313 = vmatmul.mubr.bf16.gmra.mrb[0].mxu0 %v205
    %v314 = vpop.f32.mrb[0].mxu0
    %v315 = vadd.f32 %v164, %v314
    %v316 = vpop.f32.mrb[0].mxu0
    %v317 = vadd.f32 %v168, %v316
    %v318 = vpop.f32.mrb[0].mxu0
    %v319 = vadd.f32 %v164, %v318
    %v320 = vpop.f32.mrb[0].mxu0
    %v321 = vadd.f32 %v168, %v320
    %322 = vmatprep.mubr.bf16.mxu0 0
    %323 = vmatmul.mubr.bf16.gmra.mrb[0].mxu0 %v208
    %v324 = vpop.f32.mrb[0].mxu0
    %v325 = vadd.f32 %v164, %v324
    %v326 = vpop.f32.mrb[0].mxu0
    %v327 = vadd.f32 %v168, %v326
    %v328 = vpop.f32.mrb[0].mxu0
    %v329 = vadd.f32 %v164, %v328
    %v330 = vpop.f32.mrb[0].mxu0
    %v331 = vadd.f32 %v168, %v330
    %332 = vmatprep.mubr.bf16.mxu0 0
    %333 = vmatmul.mubr.bf16.gmra.mrb[0].mxu0 %v211
    %v334 = vpop.f32.mrb[0].mxu0
    %v335 = vadd.f32 %v164, %v334
    %v336 = vpop.f32.mrb[0].mxu0
    %v337 = vadd.f32 %v168, %v336
    %v338 = vpop.f32.mrb[0].mxu0
    %v339 = vadd.f32 %v164, %v338
    %v340 = vpop.f32.mrb[0].mxu0
    %v341 = vadd.f32 %v168, %v340
    %342 = vmatprep.mubr.bf16.mxu0 0
    %343 = vmatmul.mubr.bf16.gmra.mrb[0].mxu0 %v214
    %v344 = vpop.f32.mrb[0].mxu0
    %v345 = vadd.f32 %v164, %v344
    %v346 = vpop.f32.mrb[0].mxu0
    %v347 = vadd.f32 %v168, %v346
    %v348 = vpop.f32.mrb[0].mxu0
    %v349 = vadd.f32 %v164, %v348
    %v350 = vpop.f32.mrb[0].mxu0
    %v351 = vadd.f32 %v168, %v350
    %352 = vmatprep.mubr.bf16.mxu0 0
    %353 = vmatmul.mubr.bf16.gmra.mrb[0].mxu0 %v217
    %v354 = vpop.f32.mrb[0].mxu0
    %v355 = vadd.f32 %v164, %v354
    %v356 = vpop.f32.mrb[0].mxu0
    %v357 = vadd.f32 %v168, %v356
    %v358 = vpop.f32.mrb[0].mxu0
    %v359 = vadd.f32 %v164, %v358
    %v360 = vpop.f32.mrb[0].mxu0
    %v361 = vadd.f32 %v168, %v360
    %362 = vmatprep.mubr.bf16.mxu0 0
    %363 = vmatmul.mubr.bf16.gmra.mrb[0].mxu0 %v220
    %v364 = vpop.f32.mrb[0].mxu0
    %v365 = vadd.f32 %v164, %v364
    %v366 = vpop.f32.mrb[0].mxu0
    %v367 = vadd.f32 %v168, %v366
    %v368 = vpop.f32.mrb[0].mxu0
    %v369 = vadd.f32 %v164, %v368
    %v370 = vpop.f32.mrb[0].mxu0
    %v371 = vadd.f32 %v168, %v370
    %372 = vmatprep.mubr.bf16.mxu0 0
    %373 = vmatmul.mubr.bf16.gmra.mrb[0].mxu0 %v223
    %v374 = vpop.f32.mrb[0].mxu0
    %v375 = vadd.f32 %v164, %v374
    %v376 = vpop.f32.mrb[0].mxu0
    %v377 = vadd.f32 %v168, %v376
    %v378 = vpop.f32.mrb[0].mxu0
    %v379 = vadd.f32 %v164, %v378
    %v380 = vpop.f32.mrb[0].mxu0
    %v381 = vadd.f32 %v168, %v380
    %382 = vmatprep.mubr.bf16.mxu0 0
    %383 = vmatmul.mubr.bf16.gmra.mrb[0].mxu0 %v226
    %v384 = vpop.f32.mrb[0].mxu0
    %v385 = vadd.f32 %v164, %v384
    %v386 = vpop.f32.mrb[0].mxu0
    %v387 = vadd.f32 %v168, %v386
    %v388 = vpop.f32.mrb[0].mxu0
    %v389 = vadd.f32 %v164, %v388
    %v390 = vpop.f32.mrb[0].mxu0
    %v391 = vadd.f32 %v168, %v390
    %392 = vmatprep.mubr.bf16.mxu0 0
    %393 = vmatmul.mubr.bf16.gmra.mrb[0].mxu0 %v229
    %v394 = vpop.f32.mrb[0].mxu0
    %v395 = vadd.f32 %v164, %v394
    %v396 = vpop.f32.mrb[0].mxu0
    %v397 = vadd.f32 %v168, %v396
    %v398 = vpop.f32.mrb[0].mxu0
    %v399 = vadd.f32 %v164, %v398
    %v400 = vpop.f32.mrb[0].mxu0
    %v401 = vadd.f32 %v168, %v400
    %402 = vmatprep.mubr.bf16.mxu0 0
    %403 = vmatmul.mubr.bf16.gmra.mrb[0].mxu0 %v232
    %v404 = vpop.f32.mrb[0].mxu0
    %v405 = vadd.f32 %v164, %v404
    %v406 = vpop.f32.mrb[0].mxu0
    %v407 = vadd.f32 %v168, %v406
    %v408 = vpop.f32.mrb[0].mxu0
    %v409 = vadd.f32 %v164, %v408
    %v410 = vpop.f32.mrb[0].mxu0
    %v411 = vadd.f32 %v168, %v410
    %412 = vmatprep.mubr.bf16.mxu0 0
    %413 = vmatmul.mubr.bf16.gmra.mrb[0].mxu0 %v235
    %v414 = vpop.f32.mrb[0].mxu0
    %v415 = vadd.f32 %v164, %v414
    %v416 = vpop.f32.mrb[0].mxu0
    %v417 = vadd.f32 %v168, %v416
    %v418 = vpop.f32.mrb[0].mxu0
    %v419 = vadd.f32 %v164, %v418
    %v420 = vpop.f32.mrb[0].mxu0
    %v421 = vadd.f32 %v168, %v420
    %422 = vmatprep.mubr.bf16.mxu0 0
    %423 = vmatmul.mubr.bf16.gmra.mrb[0].mxu0 %v238
    %v424 = vpop.f32.mrb[0].mxu0
    %v425 = vadd.f32 %v164, %v424
    %v426 = vpop.f32.mrb[0].mxu0
    %v427 = vadd.f32 %v168, %v426
    %v428 = vpop.f32.mrb[0].mxu0
    %v429 = vadd.f32 %v164, %v428
    %v430 = vpop.f32.mrb[0].mxu0
    %v431 = vadd.f32 %v168, %v430
    %432 = vdwg.mxu0
    %v433 = vmax.f32 %v275, 0.0
    %v434 = vmax.f32 %v277, 0.0
    %v435 = vmax.f32 %v279, 0.0
    %v436 = vmax.f32 %v281, 0.0
    %v437 = vmax.f32 %v285, 0.0
    %v438 = vmax.f32 %v287, 0.0
    %v439 = vmax.f32 %v289, 0.0
    %v440 = vmax.f32 %v291, 0.0
    %v441 = vmax.f32 %v295, 0.0
    %v442 = vmax.f32 %v297, 0.0
    %v443 = vmax.f32 %v299, 0.0
    %v444 = vmax.f32 %v301, 0.0
    %v445 = vmax.f32 %v305, 0.0
    %v446 = vmax.f32 %v307, 0.0
    %v447 = vmax.f32 %v309, 0.0
    %v448 = vmax.f32 %v311, 0.0
    %v449 = vmax.f32 %v315, 0.0
    %v450 = vmax.f32 %v317, 0.0
    %v451 = vmax.f32 %v319, 0.0
    %v452 = vmax.f32 %v321, 0.0
    %v453 = vmax.f32 %v325, 0.0
    %v454 = vmax.f32 %v327, 0.0
    %v455 = vmax.f32 %v329, 0.0
    %v456 = vmax.f32 %v331, 0.0
    %v457 = vmax.f32 %v335, 0.0
    %v458 = vmax.f32 %v337, 0.0
    %v459 = vmax.f32 %v339, 0.0
    %v460 = vmax.f32 %v341, 0.0
    %v461 = vmax.f32 %v345, 0.0
    %v462 = vmax.f32 %v347, 0.0
    %v463 = vmax.f32 %v349, 0.0
    %v464 = vmax.f32 %v351, 0.0
    %v465 = vmax.f32 %v355, 0.0
    %v466 = vmax.f32 %v357, 0.0
    %v467 = vmax.f32 %v359, 0.0
    %v468 = vmax.f32 %v361, 0.0
    %v469 = vmax.f32 %v365, 0.0
    %v470 = vmax.f32 %v367, 0.0
    %v471 = vmax.f32 %v369, 0.0
    %v472 = vmax.f32 %v371, 0.0
    %v473 = vmax.f32 %v375, 0.0
    %v474 = vmax.f32 %v377, 0.0
    %v475 = vmax.f32 %v379, 0.0
    %v476 = vmax.f32 %v381, 0.0
    %v477 = vmax.f32 %v385, 0.0
    %v478 = vmax.f32 %v387, 0.0
    %v479 = vmax.f32 %v389, 0.0
    %v480 = vmax.f32 %v391, 0.0
    %v481 = vmax.f32 %v395, 0.0
    %v482 = vmax.f32 %v397, 0.0
    %v483 = vmax.f32 %v399, 0.0
    %v484 = vmax.f32 %v401, 0.0
    %v485 = vmax.f32 %v405, 0.0
    %v486 = vmax.f32 %v407, 0.0
    %v487 = vmax.f32 %v409, 0.0
    %v488 = vmax.f32 %v411, 0.0
    %v489 = vmax.f32 %v415, 0.0
    %v490 = vmax.f32 %v417, 0.0
    %v491 = vmax.f32 %v419, 0.0
    %v492 = vmax.f32 %v421, 0.0
    %v493 = vmax.f32 %v425, 0.0
    %v494 = vmax.f32 %v427, 0.0
    %v495 = vmax.f32 %v429, 0.0
    %v496 = vmax.f32 %v431, 0.0
    %v497 = vpack.c.bf16 %v435, %v433
    %v498 = vpack.c.bf16 %v436, %v434
    %v499 = vpack.c.bf16 %v439, %v437
    %v500 = vpack.c.bf16 %v440, %v438
    %v501 = vpack.c.bf16 %v443, %v441
    %v502 = vpack.c.bf16 %v444, %v442
    %v503 = vpack.c.bf16 %v447, %v445
    %v504 = vpack.c.bf16 %v448, %v446
    %v505 = vpack.c.bf16 %v451, %v449
    %v506 = vpack.c.bf16 %v452, %v450
    %v507 = vpack.c.bf16 %v455, %v453
    %v508 = vpack.c.bf16 %v456, %v454
    %v509 = vpack.c.bf16 %v459, %v457
    %v510 = vpack.c.bf16 %v460, %v458
    %v511 = vpack.c.bf16 %v463, %v461
    %v512 = vpack.c.bf16 %v464, %v462
    %v513 = vpack.c.bf16 %v467, %v465
    %v514 = vpack.c.bf16 %v468, %v466
    %v515 = vpack.c.bf16 %v471, %v469
    %v516 = vpack.c.bf16 %v472, %v470
    %v517 = vpack.c.bf16 %v475, %v473
    %v518 = vpack.c.bf16 %v476, %v474
    %v519 = vpack.c.bf16 %v479, %v477
    %v520 = vpack.c.bf16 %v480, %v478
    %v521 = vpack.c.bf16 %v483, %v481
    %v522 = vpack.c.bf16 %v484, %v482
    %v523 = vpack.c.bf16 %v487, %v485
    %v524 = vpack.c.bf16 %v488, %v486
    %v525 = vpack.c.bf16 %v491, %v489
    %v526 = vpack.c.bf16 %v492, %v490
    %v527 = vpack.c.bf16 %v495, %v493
    %v528 = vpack.c.bf16 %v496, %v494
    %v529 = vld [vmem:[%s3] sm:$0xf]
    %v530 = vld [vmem:[%s3 + $0x4] sm:$0xf]
    %v531 = vld [vmem:[%s3 + $0x8] sm:$0xf]
    %v532 = vld [vmem:[%s3 + $0xc] sm:$0xf]
    %v533 = vld [vmem:[%s3 + $0x10] sm:$0xf]
    %v534 = vld [vmem:[%s3 + $0x14] sm:$0xf]
    %v535 = vld [vmem:[%s3 + $0x18] sm:$0xf]
    %v536 = vld [vmem:[%s3 + $0x1c] sm:$0xf]
    %v537 = vld [vmem:[%s3 + $0x20] sm:$0xf]
    %v538 = vld [vmem:[%s3 + $0x24] sm:$0xf]
    %v539 = vld [vmem:[%s3 + $0x28] sm:$0xf]
    %v540 = vld [vmem:[%s3 + $0x2c] sm:$0xf]
    %v541 = vld [vmem:[%s3 + $0x30] sm:$0xf]
    %v542 = vld [vmem:[%s3 + $0x34] sm:$0xf]
    %v543 = vld [vmem:[%s3 + $0x38] sm:$0xf]
    %v544 = vld [vmem:[%s3 + $0x3c] sm:$0xf]
    %v545 = vld [vmem:[%s3 + $0x40] sm:$0xf]
    %v546 = vld [vmem:[%s3 + $0x44] sm:$0xf]
    %v547 = vld [vmem:[%s3 + $0x48] sm:$0xf]
    %v548 = vld [vmem:[%s3 + $0x4c] sm:$0xf]
    %v549 = vld [vmem:[%s3 + $0x50] sm:$0xf]
    %v550 = vld [vmem:[%s3 + $0x54] sm:$0xf]
    %v551 = vld [vmem:[%s3 + $0x58] sm:$0xf]
    %v552 = vld [vmem:[%s3 + $0x5c] sm:$0xf]
    %v553 = vld [vmem:[%s3 + $0x60] sm:$0xf]
    %v554 = vld [vmem:[%s3 + $0x64] sm:$0xf]
    %v555 = vld [vmem:[%s3 + $0x68] sm:$0xf]
    %v556 = vld [vmem:[%s3 + $0x6c] sm:$0xf]
    %v557 = vld [vmem:[%s3 + $0x70] sm:$0xf]
    %v558 = vld [vmem:[%s3 + $0x74] sm:$0xf]
    %v559 = vld [vmem:[%s3 + $0x78] sm:$0xf]
    %v560 = vld [vmem:[%s3 + $0x7c] sm:$0xf]
    %v561 = vld [vmem:[%s4] sm:$0x1]
    %v563 = vlaneseq
    %v564 = vshrl.u32 %v563, 7
    %v565 = vsub.s32 0, %v564
    %v566 = vrot.slane %v561, %v565
    %v600 = vunpack.c.l.b16 %v529
    %v601 = vunpack.c.l.b16 %v530
    %v602 = vunpack.c.l.b16 %v531
    %v603 = vunpack.c.l.b16 %v532
    %v604 = vunpack.c.l.b16 %v533
    %v605 = vunpack.c.l.b16 %v534
    %v606 = vunpack.c.l.b16 %v535
    %v607 = vunpack.c.l.b16 %v536
    %v608 = vunpack.c.l.b16 %v537
    %v609 = vunpack.c.l.b16 %v538
    %v610 = vunpack.c.l.b16 %v539
    %v611 = vunpack.c.l.b16 %v540
    %v612 = vunpack.c.l.b16 %v541
    %v613 = vunpack.c.l.b16 %v542
    %v614 = vunpack.c.l.b16 %v543
    %v615 = vunpack.c.l.b16 %v544
    %v616 = vunpack.c.l.b16 %v545
    %v617 = vunpack.c.l.b16 %v546
    %v618 = vunpack.c.l.b16 %v547
    %v619 = vunpack.c.l.b16 %v548
    %v620 = vunpack.c.l.b16 %v549
    %v621 = vunpack.c.l.b16 %v550
    %v622 = vunpack.c.l.b16 %v551
    %v623 = vunpack.c.l.b16 %v552
    %v624 = vunpack.c.l.b16 %v553
    %v625 = vunpack.c.l.b16 %v554
    %v626 = vunpack.c.l.b16 %v555
    %v627 = vunpack.c.l.b16 %v556
    %v628 = vunpack.c.l.b16 %v557
    %v629 = vunpack.c.l.b16 %v558
    %v630 = vunpack.c.l.b16 %v559
    %v631 = vunpack.c.l.b16 %v560
    %v632 = vpack.c.b16 %v601, %v600
    %v633 = vpack.c.b16 %v603, %v602
    %v634 = vpack.c.b16 %v605, %v604
    %v635 = vpack.c.b16 %v607, %v606
    %v636 = vpack.c.b16 %v609, %v608
    %v637 = vpack.c.b16 %v611, %v610
    %v638 = vpack.c.b16 %v613, %v612
    %v639 = vpack.c.b16 %v615, %v614
    %v640 = vpack.c.b16 %v617, %v616
    %v641 = vpack.c.b16 %v619, %v618
    %v642 = vpack.c.b16 %v621, %v620
    %v643 = vpack.c.b16 %v623, %v622
    %v644 = vpack.c.b16 %v625, %v624
    %v645 = vpack.c.b16 %v627, %v626
    %v646 = vpack.c.b16 %v629, %v628
    %v647 = vpack.c.b16 %v631, %v630
    %664 = vmatprep.subr.bf16.mxu0 0
    %665 = vmatpush1.bf16.msra.mxu0 %v632
    %666 = vmatprep.subr.bf16.mxu0 0
    %667 = vmatpush1.bf16.msra.mxu0 %v633
    %668 = vmatprep.subr.bf16.mxu0 0
    %669 = vmatpush1.bf16.msra.mxu0 %v634
    %670 = vmatprep.subr.bf16.mxu0 0
    %671 = vmatpush1.bf16.msra.mxu0 %v635
    %672 = vmatprep.subr.bf16.mxu0 0
    %673 = vmatpush1.bf16.msra.mxu0 %v636
    %674 = vmatprep.subr.bf16.mxu0 0
    %675 = vmatpush1.bf16.msra.mxu0 %v637
    %676 = vmatprep.subr.bf16.mxu0 0
    %677 = vmatpush1.bf16.msra.mxu0 %v638
    %678 = vmatprep.subr.bf16.mxu0 0
    %679 = vmatpush1.bf16.msra.mxu0 %v639
    %680 = vmatprep.subr.bf16.mxu0 0
    %681 = vmatpush1.bf16.msra.mxu0 %v640
    %682 = vmatprep.subr.bf16.mxu0 0
    %683 = vmatpush1.bf16.msra.mxu0 %v641
    %684 = vmatprep.subr.bf16.mxu0 0
    %685 = vmatpush1.bf16.msra.mxu0 %v642
    %686 = vmatprep.subr.bf16.mxu0 0
    %687 = vmatpush1.bf16.msra.mxu0 %v643
    %688 = vmatprep.subr.bf16.mxu0 0
    %689 = vmatpush1.bf16.msra.mxu0 %v644
    %690 = vmatprep.subr.bf16.mxu0 0
    %691 = vmatpush1.bf16.msra.mxu0 %v645
    %692 = vmatprep.subr.bf16.mxu0 0
    %693 = vmatpush1.bf16.msra.mxu0 %v646
    %694 = vmatprep.subr.bf16.mxu0 0
    %695 = vmatpush1.bf16.msra.mxu0 %v647
    %696 = vmatprep.mubr.bf16.mxu0 %v498
    %697 = vmatmul.mubr.bf16.gmra.mrb[0].mxu0 %v497
    %v698 = vpop.f32.mrb[0].mxu0
    %v699 = vadd.f32 %v566, %v698
    %v700 = vpop.f32.mrb[0].mxu0
    %v701 = vpop.f32.mrb[0].mxu0
    %v702 = vadd.f32 %v566, %v701
    %v703 = vpop.f32.mrb[0].mxu0
    %704 = vmatprep.mubr.bf16.mxu0 %v500
    %705 = vmatmul.mubr.bf16.gmra.mrb[0].mxu0 %v499
    %v706 = vpop.f32.mrb[0].mxu0
    %v707 = vadd.f32 %v566, %v706
    %v708 = vpop.f32.mrb[0].mxu0
    %v709 = vpop.f32.mrb[0].mxu0
    %v710 = vadd.f32 %v566, %v709
    %v711 = vpop.f32.mrb[0].mxu0
    %712 = vmatprep.mubr.bf16.mxu0 %v502
    %713 = vmatmul.mubr.bf16.gmra.mrb[0].mxu0 %v501
    %v714 = vpop.f32.mrb[0].mxu0
    %v715 = vadd.f32 %v566, %v714
    %v716 = vpop.f32.mrb[0].mxu0
    %v717 = vpop.f32.mrb[0].mxu0
    %v718 = vadd.f32 %v566, %v717
    %v719 = vpop.f32.mrb[0].mxu0
    %720 = vmatprep.mubr.bf16.mxu0 %v504
    %721 = vmatmul.mubr.bf16.gmra.mrb[0].mxu0 %v503
    %v722 = vpop.f32.mrb[0].mxu0
    %v723 = vadd.f32 %v566, %v722
    %v724 = vpop.f32.mrb[0].mxu0
    %v725 = vpop.f32.mrb[0].mxu0
    %v726 = vadd.f32 %v566, %v725
    %v727 = vpop.f32.mrb[0].mxu0
    %728 = vmatprep.mubr.bf16.mxu0 %v506
    %729 = vmatmul.mubr.bf16.gmra.mrb[0].mxu0 %v505
    %v730 = vpop.f32.mrb[0].mxu0
    %v731 = vadd.f32 %v566, %v730
    %v732 = vpop.f32.mrb[0].mxu0
    %v733 = vpop.f32.mrb[0].mxu0
    %v734 = vadd.f32 %v566, %v733
    %v735 = vpop.f32.mrb[0].mxu0
    %736 = vmatprep.mubr.bf16.mxu0 %v508
    %737 = vmatmul.mubr.bf16.gmra.mrb[0].mxu0 %v507
    %v738 = vpop.f32.mrb[0].mxu0
    %v739 = vadd.f32 %v566, %v738
    %v740 = vpop.f32.mrb[0].mxu0
    %v741 = vpop.f32.mrb[0].mxu0
    %v742 = vadd.f32 %v566, %v741
    %v743 = vpop.f32.mrb[0].mxu0
    %744 = vmatprep.mubr.bf16.mxu0 %v510
    %745 = vmatmul.mubr.bf16.gmra.mrb[0].mxu0 %v509
    %v746 = vpop.f32.mrb[0].mxu0
    %v747 = vadd.f32 %v566, %v746
    %v748 = vpop.f32.mrb[0].mxu0
    %v749 = vpop.f32.mrb[0].mxu0
    %v750 = vadd.f32 %v566, %v749
    %v751 = vpop.f32.mrb[0].mxu0
    %752 = vmatprep.mubr.bf16.mxu0 %v512
    %753 = vmatmul.mubr.bf16.gmra.mrb[0].mxu0 %v511
    %v754 = vpop.f32.mrb[0].mxu0
    %v755 = vadd.f32 %v566, %v754
    %v756 = vpop.f32.mrb[0].mxu0
    %v757 = vpop.f32.mrb[0].mxu0
    %v758 = vadd.f32 %v566, %v757
    %v759 = vpop.f32.mrb[0].mxu0
    %760 = vmatprep.mubr.bf16.mxu0 %v514
    %761 = vmatmul.mubr.bf16.gmra.mrb[0].mxu0 %v513
    %v762 = vpop.f32.mrb[0].mxu0
    %v763 = vadd.f32 %v566, %v762
    %v764 = vpop.f32.mrb[0].mxu0
    %v765 = vpop.f32.mrb[0].mxu0
    %v766 = vadd.f32 %v566, %v765
    %v767 = vpop.f32.mrb[0].mxu0
    %768 = vmatprep.mubr.bf16.mxu0 %v516
    %769 = vmatmul.mubr.bf16.gmra.mrb[0].mxu0 %v515
    %v770 = vpop.f32.mrb[0].mxu0
    %v771 = vadd.f32 %v566, %v770
    %v772 = vpop.f32.mrb[0].mxu0
    %v773 = vpop.f32.mrb[0].mxu0
    %v774 = vadd.f32 %v566, %v773
    %v775 = vpop.f32.mrb[0].mxu0
    %776 = vmatprep.mubr.bf16.mxu0 %v518
    %777 = vmatmul.mubr.bf16.gmra.mrb[0].mxu0 %v517
    %v778 = vpop.f32.mrb[0].mxu0
    %v779 = vadd.f32 %v566, %v778
    %v780 = vpop.f32.mrb[0].mxu0
    %v781 = vpop.f32.mrb[0].mxu0
    %v782 = vadd.f32 %v566, %v781
    %v783 = vpop.f32.mrb[0].mxu0
    %784 = vmatprep.mubr.bf16.mxu0 %v520
    %785 = vmatmul.mubr.bf16.gmra.mrb[0].mxu0 %v519
    %v786 = vpop.f32.mrb[0].mxu0
    %v787 = vadd.f32 %v566, %v786
    %v788 = vpop.f32.mrb[0].mxu0
    %v789 = vpop.f32.mrb[0].mxu0
    %v790 = vadd.f32 %v566, %v789
    %v791 = vpop.f32.mrb[0].mxu0
    %792 = vmatprep.mubr.bf16.mxu0 %v522
    %793 = vmatmul.mubr.bf16.gmra.mrb[0].mxu0 %v521
    %v794 = vpop.f32.mrb[0].mxu0
    %v795 = vadd.f32 %v566, %v794
    %v796 = vpop.f32.mrb[0].mxu0
    %v797 = vpop.f32.mrb[0].mxu0
    %v798 = vadd.f32 %v566, %v797
    %v799 = vpop.f32.mrb[0].mxu0
    %800 = vmatprep.mubr.bf16.mxu0 %v524
    %801 = vmatmul.mubr.bf16.gmra.mrb[0].mxu0 %v523
    %v802 = vpop.f32.mrb[0].mxu0
    %v803 = vadd.f32 %v566, %v802
    %v804 = vpop.f32.mrb[0].mxu0
    %v805 = vpop.f32.mrb[0].mxu0
    %v806 = vadd.f32 %v566, %v805
    %v807 = vpop.f32.mrb[0].mxu0
    %808 = vmatprep.mubr.bf16.mxu0 %v526
    %809 = vmatmul.mubr.bf16.gmra.mrb[0].mxu0 %v525
    %v810 = vpop.f32.mrb[0].mxu0
    %v811 = vadd.f32 %v566, %v810
    %v812 = vpop.f32.mrb[0].mxu0
    %v813 = vpop.f32.mrb[0].mxu0
    %v814 = vadd.f32 %v566, %v813
    %v815 = vpop.f32.mrb[0].mxu0
    %816 = vmatprep.mubr.bf16.mxu0 %v528
    %817 = vmatmul.mubr.bf16.gmra.mrb[0].mxu0 %v527
    %v818 = vpop.f32.mrb[0].mxu0
    %v819 = vadd.f32 %v566, %v818
    %v820 = vpop.f32.mrb[0].mxu0
    %v821 = vpop.f32.mrb[0].mxu0
    %v822 = vadd.f32 %v566, %v821
    %v823 = vpop.f32.mrb[0].mxu0
    %824 = vdwg.mxu0
    %v825 = vmax.f32 %v699, 0.0
    %v826 = vmax.f32 %v702, 0.0
    %v827 = vmax.f32 %v707, 0.0
    %v828 = vmax.f32 %v710, 0.0
    %v829 = vmax.f32 %v715, 0.0
    %v830 = vmax.f32 %v718, 0.0
    %v831 = vmax.f32 %v723, 0.0
    %v832 = vmax.f32 %v726, 0.0
    %v833 = vmax.f32 %v731, 0.0
    %v834 = vmax.f32 %v734, 0.0
    %v835 = vmax.f32 %v739, 0.0
    %v836 = vmax.f32 %v742, 0.0
    %v837 = vmax.f32 %v747, 0.0
    %v838 = vmax.f32 %v750, 0.0
    %v839 = vmax.f32 %v755, 0.0
    %v840 = vmax.f32 %v758, 0.0
    %v841 = vmax.f32 %v763, 0.0
    %v842 = vmax.f32 %v766, 0.0
    %v843 = vmax.f32 %v771, 0.0
    %v844 = vmax.f32 %v774, 0.0
    %v845 = vmax.f32 %v779, 0.0
    %v846 = vmax.f32 %v782, 0.0
    %v847 = vmax.f32 %v787, 0.0
    %v848 = vmax.f32 %v790, 0.0
    %v849 = vmax.f32 %v795, 0.0
    %v850 = vmax.f32 %v798, 0.0
    %v851 = vmax.f32 %v803, 0.0
    %v852 = vmax.f32 %v806, 0.0
    %v853 = vmax.f32 %v811, 0.0
    %v854 = vmax.f32 %v814, 0.0
    %v855 = vmax.f32 %v819, 0.0
    %v856 = vmax.f32 %v822, 0.0
    %v857 = vpack.c.bf16 %v826, %v825
    %v858 = vpack.c.bf16 %v828, %v827
    %v859 = vpack.c.bf16 %v830, %v829
    %v860 = vpack.c.bf16 %v832, %v831
    %v861 = vpack.c.bf16 %v834, %v833
    %v862 = vpack.c.bf16 %v836, %v835
    %v863 = vpack.c.bf16 %v838, %v837
    %v864 = vpack.c.bf16 %v840, %v839
    %v865 = vpack.c.bf16 %v842, %v841
    %v866 = vpack.c.bf16 %v844, %v843
    %v867 = vpack.c.bf16 %v846, %v845
    %v868 = vpack.c.bf16 %v848, %v847
    %v869 = vpack.c.bf16 %v850, %v849
    %v870 = vpack.c.bf16 %v852, %v851
    %v871 = vpack.c.bf16 %v854, %v853
    %v872 = vpack.c.bf16 %v856, %v855
    %v873 = vld [vmem:[%s5] sm:$0xff]
    %v874 = vld [vmem:[%s5 + $0x8] sm:$0xff]
    %v875 = vld [vmem:[%s5 + $0x10] sm:$0xff]
    %v876 = vld [vmem:[%s5 + $0x18] sm:$0xff]
    %v877 = vld [vmem:[%s5 + $0x20] sm:$0xff]
    %v878 = vld [vmem:[%s5 + $0x28] sm:$0xff]
    %v879 = vld [vmem:[%s5 + $0x30] sm:$0xff]
    %v880 = vld [vmem:[%s5 + $0x38] sm:$0xff]
    %v881 = vld [vmem:[%s5 + $0x40] sm:$0xff]
    %v882 = vld [vmem:[%s5 + $0x48] sm:$0xff]
    %v883 = vld [vmem:[%s5 + $0x50] sm:$0xff]
    %v884 = vld [vmem:[%s5 + $0x58] sm:$0xff]
    %v885 = vld [vmem:[%s5 + $0x60] sm:$0xff]
    %v886 = vld [vmem:[%s5 + $0x68] sm:$0xff]
    %v887 = vld [vmem:[%s5 + $0x70] sm:$0xff]
    %v888 = vld [vmem:[%s5 + $0x78] sm:$0xff]
    %v889 = vld [vmem:[%s6] sm:$0x3]
    %v891 = vlaneseq
    %v892 = vshrl.u32 %v891, 7
    %v893 = vsub.s32 0, %v892
    %v894 = vrot.slane %v889, %v893
    %v895 = vlaneseq
    %v896 = vshrl.u32 %v895, 7
    %v897 = vsub.s32 1, %v896
    %v898 = vrot.slane %v889, %v897
    %v917 = vunpack.c.l.b16 %v873
    %v918 = vunpack.c.h.b16 %v873
    %v919 = vunpack.c.l.b16 %v874
    %v920 = vunpack.c.h.b16 %v874
    %v921 = vunpack.c.l.b16 %v875
    %v922 = vunpack.c.h.b16 %v875
    %v923 = vunpack.c.l.b16 %v876
    %v924 = vunpack.c.h.b16 %v876
    %v925 = vunpack.c.l.b16 %v877
    %v926 = vunpack.c.h.b16 %v877
    %v927 = vunpack.c.l.b16 %v878
    %v928 = vunpack.c.h.b16 %v878
    %v929 = vunpack.c.l.b16 %v879
    %v930 = vunpack.c.h.b16 %v879
    %v931 = vunpack.c.l.b16 %v880
    %v932 = vunpack.c.h.b16 %v880
    %v933 = vunpack.c.l.b16 %v881
    %v934 = vunpack.c.h.b16 %v881
    %v935 = vunpack.c.l.b16 %v882
    %v936 = vunpack.c.h.b16 %v882
    %v937 = vunpack.c.l.b16 %v883
    %v938 = vunpack.c.h.b16 %v883
    %v939 = vunpack.c.l.b16 %v884
    %v940 = vunpack.c.h.b16 %v884
    %v941 = vunpack.c.l.b16 %v885
    %v942 = vunpack.c.h.b16 %v885
    %v943 = vunpack.c.l.b16 %v886
    %v944 = vunpack.c.h.b16 %v886
    %v945 = vunpack.c.l.b16 %v887
    %v946 = vunpack.c.h.b16 %v887
    %v947 = vunpack.c.l.b16 %v888
    %v948 = vunpack.c.h.b16 %v888
    %v949 = vpack.c.b16 %v919, %v917
    %v950 = vpack.c.b16 %v920, %v918
    %v951 = vpack.c.b16 %v923, %v921
    %v952 = vpack.c.b16 %v924, %v922
    %v953 = vpack.c.b16 %v927, %v925
    %v954 = vpack.c.b16 %v928, %v926
    %v955 = vpack.c.b16 %v931, %v929
    %v956 = vpack.c.b16 %v932, %v930
    %v957 = vpack.c.b16 %v935, %v933
    %v958 = vpack.c.b16 %v936, %v934
    %v959 = vpack.c.b16 %v939, %v937
    %v960 = vpack.c.b16 %v940, %v938
    %v961 = vpack.c.b16 %v943, %v941
    %v962 = vpack.c.b16 %v944, %v942
    %v963 = vpack.c.b16 %v947, %v945
    %v964 = vpack.c.b16 %v948, %v946
    %981 = vmatprep.subr.bf16.mxu0 %v950
    %982 = vmatpush1.bf16.msra.mxu0 %v949
    %983 = vmatprep.subr.bf16.mxu0 %v952
    %984 = vmatpush1.bf16.msra.mxu0 %v951
    %985 = vmatprep.subr.bf16.mxu0 %v954
    %986 = vmatpush1.bf16.msra.mxu0 %v953
    %987 = vmatprep.subr.bf16.mxu0 %v956
    %988 = vmatpush1.bf16.msra.mxu0 %v955
    %989 = vmatprep.subr.bf16.mxu0 %v958
    %990 = vmatpush1.bf16.msra.mxu0 %v957
    %991 = vmatprep.subr.bf16.mxu0 %v960
    %992 = vmatpush1.bf16.msra.mxu0 %v959
    %993 = vmatprep.subr.bf16.mxu0 %v962
    %994 = vmatpush1.bf16.msra.mxu0 %v961
    %995 = vmatprep.subr.bf16.mxu0 %v964
    %996 = vmatpush1.bf16.msra.mxu0 %v963
    %997 = vmatprep.subr.bf16.mxu0 0
    %998 = vmatpush1.bf16.msra.mxu0 0
    %999 = vmatprep.subr.bf16.mxu0 0
    %1000 = vmatpush1.bf16.msra.mxu0 0
    %1001 = vmatprep.subr.bf16.mxu0 0
    %1002 = vmatpush1.bf16.msra.mxu0 0
    %1003 = vmatprep.subr.bf16.mxu0 0
    %1004 = vmatpush1.bf16.msra.mxu0 0
    %1005 = vmatprep.subr.bf16.mxu0 0
    %1006 = vmatpush1.bf16.msra.mxu0 0
    %1007 = vmatprep.subr.bf16.mxu0 0
    %1008 = vmatpush1.bf16.msra.mxu0 0
    %1009 = vmatprep.subr.bf16.mxu0 0
    %1010 = vmatpush1.bf16.msra.mxu0 0
    %1011 = vmatprep.subr.bf16.mxu0 0
    %1012 = vmatpush1.bf16.msra.mxu0 0
    %1013 = vmatprep.mubr.bf16.mxu0 0
    %1014 = vmatmul.mubr.bf16.gmra.mrb[0].mxu0 %v857
    %v1015 = vpop.f32.mrb[0].mxu0
    %v1016 = vadd.f32 %v894, %v1015
    %v1017 = vpop.f32.mrb[0].mxu0
    %v1018 = vadd.f32 %v898, %v1017
    %v1019 = vpop.f32.mrb[0].mxu0
    %v1020 = vadd.f32 %v894, %v1019
    %v1021 = vpop.f32.mrb[0].mxu0
    %v1022 = vadd.f32 %v898, %v1021
    %1023 = vmatprep.mubr.bf16.mxu0 0
    %1024 = vmatmul.mubr.bf16.gmra.mrb[0].mxu0 %v858
    %v1025 = vpop.f32.mrb[0].mxu0
    %v1026 = vadd.f32 %v894, %v1025
    %v1027 = vpop.f32.mrb[0].mxu0
    %v1028 = vadd.f32 %v898, %v1027
    %v1029 = vpop.f32.mrb[0].mxu0
    %v1030 = vadd.f32 %v894, %v1029
    %v1031 = vpop.f32.mrb[0].mxu0
    %v1032 = vadd.f32 %v898, %v1031
    %1033 = vmatprep.mubr.bf16.mxu0 0
    %1034 = vmatmul.mubr.bf16.gmra.mrb[0].mxu0 %v859
    %v1035 = vpop.f32.mrb[0].mxu0
    %v1036 = vadd.f32 %v894, %v1035
    %v1037 = vpop.f32.mrb[0].mxu0
    %v1038 = vadd.f32 %v898, %v1037
    %v1039 = vpop.f32.mrb[0].mxu0
    %v1040 = vadd.f32 %v894, %v1039
    %v1041 = vpop.f32.mrb[0].mxu0
    %v1042 = vadd.f32 %v898, %v1041
    %1043 = vmatprep.mubr.bf16.mxu0 0
    %1044 = vmatmul.mubr.bf16.gmra.mrb[0].mxu0 %v860
    %v1045 = vpop.f32.mrb[0].mxu0
    %v1046 = vadd.f32 %v894, %v1045
    %v1047 = vpop.f32.mrb[0].mxu0
    %v1048 = vadd.f32 %v898, %v1047
    %v1049 = vpop.f32.mrb[0].mxu0
    %v1050 = vadd.f32 %v894, %v1049
    %v1051 = vpop.f32.mrb[0].mxu0
    %v1052 = vadd.f32 %v898, %v1051
    %1053 = vmatprep.mubr.bf16.mxu0 0
    %1054 = vmatmul.mubr.bf16.gmra.mrb[0].mxu0 %v861
    %v1055 = vpop.f32.mrb[0].mxu0
    %v1056 = vadd.f32 %v894, %v1055
    %v1057 = vpop.f32.mrb[0].mxu0
    %v1058 = vadd.f32 %v898, %v1057
    %v1059 = vpop.f32.mrb[0].mxu0
    %v1060 = vadd.f32 %v894, %v1059
    %v1061 = vpop.f32.mrb[0].mxu0
    %v1062 = vadd.f32 %v898, %v1061
    %1063 = vmatprep.mubr.bf16.mxu0 0
    %1064 = vmatmul.mubr.bf16.gmra.mrb[0].mxu0 %v862
    %v1065 = vpop.f32.mrb[0].mxu0
    %v1066 = vadd.f32 %v894, %v1065
    %v1067 = vpop.f32.mrb[0].mxu0
    %v1068 = vadd.f32 %v898, %v1067
    %v1069 = vpop.f32.mrb[0].mxu0
    %v1070 = vadd.f32 %v894, %v1069
    %v1071 = vpop.f32.mrb[0].mxu0
    %v1072 = vadd.f32 %v898, %v1071
    %1073 = vmatprep.mubr.bf16.mxu0 0
    %1074 = vmatmul.mubr.bf16.gmra.mrb[0].mxu0 %v863
    %v1075 = vpop.f32.mrb[0].mxu0
    %v1076 = vadd.f32 %v894, %v1075
    %v1077 = vpop.f32.mrb[0].mxu0
    %v1078 = vadd.f32 %v898, %v1077
    %v1079 = vpop.f32.mrb[0].mxu0
    %v1080 = vadd.f32 %v894, %v1079
    %v1081 = vpop.f32.mrb[0].mxu0
    %v1082 = vadd.f32 %v898, %v1081
    %1083 = vmatprep.mubr.bf16.mxu0 0
    %1084 = vmatmul.mubr.bf16.gmra.mrb[0].mxu0 %v864
    %v1085 = vpop.f32.mrb[0].mxu0
    %v1086 = vadd.f32 %v894, %v1085
    %v1087 = vpop.f32.mrb[0].mxu0
    %v1088 = vadd.f32 %v898, %v1087
    %v1089 = vpop.f32.mrb[0].mxu0
    %v1090 = vadd.f32 %v894, %v1089
    %v1091 = vpop.f32.mrb[0].mxu0
    %v1092 = vadd.f32 %v898, %v1091
    %1093 = vmatprep.mubr.bf16.mxu0 0
    %1094 = vmatmul.mubr.bf16.gmra.mrb[0].mxu0 %v865
    %v1095 = vpop.f32.mrb[0].mxu0
    %v1096 = vadd.f32 %v894, %v1095
    %v1097 = vpop.f32.mrb[0].mxu0
    %v1098 = vadd.f32 %v898, %v1097
    %v1099 = vpop.f32.mrb[0].mxu0
    %v1100 = vadd.f32 %v894, %v1099
    %v1101 = vpop.f32.mrb[0].mxu0
    %v1102 = vadd.f32 %v898, %v1101
    %1103 = vmatprep.mubr.bf16.mxu0 0
    %1104 = vmatmul.mubr.bf16.gmra.mrb[0].mxu0 %v866
    %v1105 = vpop.f32.mrb[0].mxu0
    %v1106 = vadd.f32 %v894, %v1105
    %v1107 = vpop.f32.mrb[0].mxu0
    %v1108 = vadd.f32 %v898, %v1107
    %v1109 = vpop.f32.mrb[0].mxu0
    %v1110 = vadd.f32 %v894, %v1109
    %v1111 = vpop.f32.mrb[0].mxu0
    %v1112 = vadd.f32 %v898, %v1111
    %1113 = vmatprep.mubr.bf16.mxu0 0
    %1114 = vmatmul.mubr.bf16.gmra.mrb[0].mxu0 %v867
    %v1115 = vpop.f32.mrb[0].mxu0
    %v1116 = vadd.f32 %v894, %v1115
    %v1117 = vpop.f32.mrb[0].mxu0
    %v1118 = vadd.f32 %v898, %v1117
    %v1119 = vpop.f32.mrb[0].mxu0
    %v1120 = vadd.f32 %v894, %v1119
    %v1121 = vpop.f32.mrb[0].mxu0
    %v1122 = vadd.f32 %v898, %v1121
    %1123 = vmatprep.mubr.bf16.mxu0 0
    %1124 = vmatmul.mubr.bf16.gmra.mrb[0].mxu0 %v868
    %v1125 = vpop.f32.mrb[0].mxu0
    %v1126 = vadd.f32 %v894, %v1125
    %v1127 = vpop.f32.mrb[0].mxu0
    %v1128 = vadd.f32 %v898, %v1127
    %v1129 = vpop.f32.mrb[0].mxu0
    %v1130 = vadd.f32 %v894, %v1129
    %v1131 = vpop.f32.mrb[0].mxu0
    %v1132 = vadd.f32 %v898, %v1131
    %1133 = vmatprep.mubr.bf16.mxu0 0
    %1134 = vmatmul.mubr.bf16.gmra.mrb[0].mxu0 %v869
    %v1135 = vpop.f32.mrb[0].mxu0
    %v1136 = vadd.f32 %v894, %v1135
    %v1137 = vpop.f32.mrb[0].mxu0
    %v1138 = vadd.f32 %v898, %v1137
    %v1139 = vpop.f32.mrb[0].mxu0
    %v1140 = vadd.f32 %v894, %v1139
    %v1141 = vpop.f32.mrb[0].mxu0
    %v1142 = vadd.f32 %v898, %v1141
    %1143 = vmatprep.mubr.bf16.mxu0 0
    %1144 = vmatmul.mubr.bf16.gmra.mrb[0].mxu0 %v870
    %v1145 = vpop.f32.mrb[0].mxu0
    %v1146 = vadd.f32 %v894, %v1145
    %v1147 = vpop.f32.mrb[0].mxu0
    %v1148 = vadd.f32 %v898, %v1147
    %v1149 = vpop.f32.mrb[0].mxu0
    %v1150 = vadd.f32 %v894, %v1149
    %v1151 = vpop.f32.mrb[0].mxu0
    %v1152 = vadd.f32 %v898, %v1151
    %1153 = vmatprep.mubr.bf16.mxu0 0
    %1154 = vmatmul.mubr.bf16.gmra.mrb[0].mxu0 %v871
    %v1155 = vpop.f32.mrb[0].mxu0
    %v1156 = vadd.f32 %v894, %v1155
    %v1157 = vpop.f32.mrb[0].mxu0
    %v1158 = vadd.f32 %v898, %v1157
    %v1159 = vpop.f32.mrb[0].mxu0
    %v1160 = vadd.f32 %v894, %v1159
    %v1161 = vpop.f32.mrb[0].mxu0
    %v1162 = vadd.f32 %v898, %v1161
    %1163 = vmatprep.mubr.bf16.mxu0 0
    %1164 = vmatmul.mubr.bf16.gmra.mrb[0].mxu0 %v872
    %v1165 = vpop.f32.mrb[0].mxu0
    %v1166 = vadd.f32 %v894, %v1165
    %v1167 = vpop.f32.mrb[0].mxu0
    %v1168 = vadd.f32 %v898, %v1167
    %v1169 = vpop.f32.mrb[0].mxu0
    %v1170 = vadd.f32 %v894, %v1169
    %v1171 = vpop.f32.mrb[0].mxu0
    %v1172 = vadd.f32 %v898, %v1171
    %1173 = vdwg.mxu0
    %v1174 = vmax.f32 %v1016, 0.0
    %v1175 = vmax.f32 %v1018, 0.0
    %v1176 = vmax.f32 %v1020, 0.0
    %v1177 = vmax.f32 %v1022, 0.0
    %v1178 = vmax.f32 %v1026, 0.0
    %v1179 = vmax.f32 %v1028, 0.0
    %v1180 = vmax.f32 %v1030, 0.0
    %v1181 = vmax.f32 %v1032, 0.0
    %v1182 = vmax.f32 %v1036, 0.0
    %v1183 = vmax.f32 %v1038, 0.0
    %v1184 = vmax.f32 %v1040, 0.0
    %v1185 = vmax.f32 %v1042, 0.0
    %v1186 = vmax.f32 %v1046, 0.0
    %v1187 = vmax.f32 %v1048, 0.0
    %v1188 = vmax.f32 %v1050, 0.0
    %v1189 = vmax.f32 %v1052, 0.0
    %v1190 = vmax.f32 %v1056, 0.0
    %v1191 = vmax.f32 %v1058, 0.0
    %v1192 = vmax.f32 %v1060, 0.0
    %v1193 = vmax.f32 %v1062, 0.0
    %v1194 = vmax.f32 %v1066, 0.0
    %v1195 = vmax.f32 %v1068, 0.0
    %v1196 = vmax.f32 %v1070, 0.0
    %v1197 = vmax.f32 %v1072, 0.0
    %v1198 = vmax.f32 %v1076, 0.0
    %v1199 = vmax.f32 %v1078, 0.0
    %v1200 = vmax.f32 %v1080, 0.0
    %v1201 = vmax.f32 %v1082, 0.0
    %v1202 = vmax.f32 %v1086, 0.0
    %v1203 = vmax.f32 %v1088, 0.0
    %v1204 = vmax.f32 %v1090, 0.0
    %v1205 = vmax.f32 %v1092, 0.0
    %v1206 = vmax.f32 %v1096, 0.0
    %v1207 = vmax.f32 %v1098, 0.0
    %v1208 = vmax.f32 %v1100, 0.0
    %v1209 = vmax.f32 %v1102, 0.0
    %v1210 = vmax.f32 %v1106, 0.0
    %v1211 = vmax.f32 %v1108, 0.0
    %v1212 = vmax.f32 %v1110, 0.0
    %v1213 = vmax.f32 %v1112, 0.0
    %v1214 = vmax.f32 %v1116, 0.0
    %v1215 = vmax.f32 %v1118, 0.0
    %v1216 = vmax.f32 %v1120, 0.0
    %v1217 = vmax.f32 %v1122, 0.0
    %v1218 = vmax.f32 %v1126, 0.0
    %v1219 = vmax.f32 %v1128, 0.0
    %v1220 = vmax.f32 %v1130, 0.0
    %v1221 = vmax.f32 %v1132, 0.0
    %v1222 = vmax.f32 %v1136, 0.0
    %v1223 = vmax.f32 %v1138, 0.0
    %v1224 = vmax.f32 %v1140, 0.0
    %v1225 = vmax.f32 %v1142, 0.0
    %v1226 = vmax.f32 %v1146, 0.0
    %v1227 = vmax.f32 %v1148, 0.0
    %v1228 = vmax.f32 %v1150, 0.0
    %v1229 = vmax.f32 %v1152, 0.0
    %v1230 = vmax.f32 %v1156, 0.0
    %v1231 = vmax.f32 %v1158, 0.0
    %v1232 = vmax.f32 %v1160, 0.0
    %v1233 = vmax.f32 %v1162, 0.0
    %v1234 = vmax.f32 %v1166, 0.0
    %v1235 = vmax.f32 %v1168, 0.0
    %v1236 = vmax.f32 %v1170, 0.0
    %v1237 = vmax.f32 %v1172, 0.0
    %v1238 = vadd.f32 %v1174, %v433
    %v1239 = vadd.f32 %v1175, %v434
    %v1240 = vadd.f32 %v1176, %v435
    %v1241 = vadd.f32 %v1177, %v436
    %v1242 = vadd.f32 %v1178, %v437
    %v1243 = vadd.f32 %v1179, %v438
    %v1244 = vadd.f32 %v1180, %v439
    %v1245 = vadd.f32 %v1181, %v440
    %v1246 = vadd.f32 %v1182, %v441
    %v1247 = vadd.f32 %v1183, %v442
    %v1248 = vadd.f32 %v1184, %v443
    %v1249 = vadd.f32 %v1185, %v444
    %v1250 = vadd.f32 %v1186, %v445
    %v1251 = vadd.f32 %v1187, %v446
    %v1252 = vadd.f32 %v1188, %v447
    %v1253 = vadd.f32 %v1189, %v448
    %v1254 = vadd.f32 %v1190, %v449
    %v1255 = vadd.f32 %v1191, %v450
    %v1256 = vadd.f32 %v1192, %v451
    %v1257 = vadd.f32 %v1193, %v452
    %v1258 = vadd.f32 %v1194, %v453
    %v1259 = vadd.f32 %v1195, %v454
    %v1260 = vadd.f32 %v1196, %v455
    %v1261 = vadd.f32 %v1197, %v456
    %v1262 = vadd.f32 %v1198, %v457
    %v1263 = vadd.f32 %v1199, %v458
    %v1264 = vadd.f32 %v1200, %v459
    %v1265 = vadd.f32 %v1201, %v460
    %v1266 = vadd.f32 %v1202, %v461
    %v1267 = vadd.f32 %v1203, %v462
    %v1268 = vadd.f32 %v1204, %v463
    %v1269 = vadd.f32 %v1205, %v464
    %v1270 = vadd.f32 %v1206, %v465
    %v1271 = vadd.f32 %v1207, %v466
    %v1272 = vadd.f32 %v1208, %v467
    %v1273 = vadd.f32 %v1209, %v468
    %v1274 = vadd.f32 %v1210, %v469
    %v1275 = vadd.f32 %v1211, %v470
    %v1276 = vadd.f32 %v1212, %v471
    %v1277 = vadd.f32 %v1213, %v472
    %v1278 = vadd.f32 %v1214, %v473
    %v1279 = vadd.f32 %v1215, %v474
    %v1280 = vadd.f32 %v1216, %v475
    %v1281 = vadd.f32 %v1217, %v476
    %v1282 = vadd.f32 %v1218, %v477
    %v1283 = vadd.f32 %v1219, %v478
    %v1284 = vadd.f32 %v1220, %v479
    %v1285 = vadd.f32 %v1221, %v480
    %v1286 = vadd.f32 %v1222, %v481
    %v1287 = vadd.f32 %v1223, %v482
    %v1288 = vadd.f32 %v1224, %v483
    %v1289 = vadd.f32 %v1225, %v484
    %v1290 = vadd.f32 %v1226, %v485
    %v1291 = vadd.f32 %v1227, %v486
    %v1292 = vadd.f32 %v1228, %v487
    %v1293 = vadd.f32 %v1229, %v488
    %v1294 = vadd.f32 %v1230, %v489
    %v1295 = vadd.f32 %v1231, %v490
    %v1296 = vadd.f32 %v1232, %v491
    %v1297 = vadd.f32 %v1233, %v492
    %v1298 = vadd.f32 %v1234, %v493
    %v1299 = vadd.f32 %v1235, %v494
    %v1300 = vadd.f32 %v1236, %v495
    %v1301 = vadd.f32 %v1237, %v496
    %v1302 = vpack.c.bf16 %v1240, %v1238
    %v1303 = vpack.c.bf16 %v1241, %v1239
    %v1304 = vpack.c.bf16 %v1244, %v1242
    %v1305 = vpack.c.bf16 %v1245, %v1243
    %v1306 = vpack.c.bf16 %v1248, %v1246
    %v1307 = vpack.c.bf16 %v1249, %v1247
    %v1308 = vpack.c.bf16 %v1252, %v1250
    %v1309 = vpack.c.bf16 %v1253, %v1251
    %v1310 = vpack.c.bf16 %v1256, %v1254
    %v1311 = vpack.c.bf16 %v1257, %v1255
    %v1312 = vpack.c.bf16 %v1260, %v1258
    %v1313 = vpack.c.bf16 %v1261, %v1259
    %v1314 = vpack.c.bf16 %v1264, %v1262
    %v1315 = vpack.c.bf16 %v1265, %v1263
    %v1316 = vpack.c.bf16 %v1268, %v1266
    %v1317 = vpack.c.bf16 %v1269, %v1267
    %v1318 = vpack.c.bf16 %v1272, %v1270
    %v1319 = vpack.c.bf16 %v1273, %v1271
    %v1320 = vpack.c.bf16 %v1276, %v1274
    %v1321 = vpack.c.bf16 %v1277, %v1275
    %v1322 = vpack.c.bf16 %v1280, %v1278
    %v1323 = vpack.c.bf16 %v1281, %v1279
    %v1324 = vpack.c.bf16 %v1284, %v1282
    %v1325 = vpack.c.bf16 %v1285, %v1283
    %v1326 = vpack.c.bf16 %v1288, %v1286
    %v1327 = vpack.c.bf16 %v1289, %v1287
    %v1328 = vpack.c.bf16 %v1292, %v1290
    %v1329 = vpack.c.bf16 %v1293, %v1291
    %v1330 = vpack.c.bf16 %v1296, %v1294
    %v1331 = vpack.c.bf16 %v1297, %v1295
    %v1332 = vpack.c.bf16 %v1300, %v1298
    %v1333 = vpack.c.bf16 %v1301, %v1299
    %1334 = vmatprep.subr.bf16.mxu0 0
    %1335 = vmatpush1.bf16.msra.mxu0 %v632
    %1336 = vmatprep.subr.bf16.mxu0 0
    %1337 = vmatpush1.bf16.msra.mxu0 %v633
    %1338 = vmatprep.subr.bf16.mxu0 0
    %1339 = vmatpush1.bf16.msra.mxu0 %v634
    %1340 = vmatprep.subr.bf16.mxu0 0
    %1341 = vmatpush1.bf16.msra.mxu0 %v635
    %1342 = vmatprep.subr.bf16.mxu0 0
    %1343 = vmatpush1.bf16.msra.mxu0 %v636
    %1344 = vmatprep.subr.bf16.mxu0 0
    %1345 = vmatpush1.bf16.msra.mxu0 %v637
    %1346 = vmatprep.subr.bf16.mxu0 0
    %1347 = vmatpush1.bf16.msra.mxu0 %v638
    %1348 = vmatprep.subr.bf16.mxu0 0
    %1349 = vmatpush1.bf16.msra.mxu0 %v639
    %1350 = vmatprep.subr.bf16.mxu0 0
    %1351 = vmatpush1.bf16.msra.mxu0 %v640
    %1352 = vmatprep.subr.bf16.mxu0 0
    %1353 = vmatpush1.bf16.msra.mxu0 %v641
    %1354 = vmatprep.subr.bf16.mxu0 0
    %1355 = vmatpush1.bf16.msra.mxu0 %v642
    %1356 = vmatprep.subr.bf16.mxu0 0
    %1357 = vmatpush1.bf16.msra.mxu0 %v643
    %1358 = vmatprep.subr.bf16.mxu0 0
    %1359 = vmatpush1.bf16.msra.mxu0 %v644
    %1360 = vmatprep.subr.bf16.mxu0 0
    %1361 = vmatpush1.bf16.msra.mxu0 %v645
    %1362 = vmatprep.subr.bf16.mxu0 0
    %1363 = vmatpush1.bf16.msra.mxu0 %v646
    %1364 = vmatprep.subr.bf16.mxu0 0
    %1365 = vmatpush1.bf16.msra.mxu0 %v647
    %1366 = vmatprep.mubr.bf16.mxu0 %v1303
    %1367 = vmatmul.mubr.bf16.gmra.mrb[0].mxu0 %v1302
    %v1368 = vpop.f32.mrb[0].mxu0
    %v1369 = vadd.f32 %v566, %v1368
    %v1370 = vpop.f32.mrb[0].mxu0
    %v1371 = vpop.f32.mrb[0].mxu0
    %v1372 = vadd.f32 %v566, %v1371
    %v1373 = vpop.f32.mrb[0].mxu0
    %1374 = vmatprep.mubr.bf16.mxu0 %v1305
    %1375 = vmatmul.mubr.bf16.gmra.mrb[0].mxu0 %v1304
    %v1376 = vpop.f32.mrb[0].mxu0
    %v1377 = vadd.f32 %v566, %v1376
    %v1378 = vpop.f32.mrb[0].mxu0
    %v1379 = vpop.f32.mrb[0].mxu0
    %v1380 = vadd.f32 %v566, %v1379
    %v1381 = vpop.f32.mrb[0].mxu0
    %1382 = vmatprep.mubr.bf16.mxu0 %v1307
    %1383 = vmatmul.mubr.bf16.gmra.mrb[0].mxu0 %v1306
    %v1384 = vpop.f32.mrb[0].mxu0
    %v1385 = vadd.f32 %v566, %v1384
    %v1386 = vpop.f32.mrb[0].mxu0
    %v1387 = vpop.f32.mrb[0].mxu0
    %v1388 = vadd.f32 %v566, %v1387
    %v1389 = vpop.f32.mrb[0].mxu0
    %1390 = vmatprep.mubr.bf16.mxu0 %v1309
    %1391 = vmatmul.mubr.bf16.gmra.mrb[0].mxu0 %v1308
    %v1392 = vpop.f32.mrb[0].mxu0
    %v1393 = vadd.f32 %v566, %v1392
    %v1394 = vpop.f32.mrb[0].mxu0
    %v1395 = vpop.f32.mrb[0].mxu0
    %v1396 = vadd.f32 %v566, %v1395
    %v1397 = vpop.f32.mrb[0].mxu0
    %1398 = vmatprep.mubr.bf16.mxu0 %v1311
    %1399 = vmatmul.mubr.bf16.gmra.mrb[0].mxu0 %v1310
    %v1400 = vpop.f32.mrb[0].mxu0
    %v1401 = vadd.f32 %v566, %v1400
    %v1402 = vpop.f32.mrb[0].mxu0
    %v1403 = vpop.f32.mrb[0].mxu0
    %v1404 = vadd.f32 %v566, %v1403
    %v1405 = vpop.f32.mrb[0].mxu0
    %1406 = vmatprep.mubr.bf16.mxu0 %v1313
    %1407 = vmatmul.mubr.bf16.gmra.mrb[0].mxu0 %v1312
    %v1408 = vpop.f32.mrb[0].mxu0
    %v1409 = vadd.f32 %v566, %v1408
    %v1410 = vpop.f32.mrb[0].mxu0
    %v1411 = vpop.f32.mrb[0].mxu0
    %v1412 = vadd.f32 %v566, %v1411
    %v1413 = vpop.f32.mrb[0].mxu0
    %1414 = vmatprep.mubr.bf16.mxu0 %v1315
    %1415 = vmatmul.mubr.bf16.gmra.mrb[0].mxu0 %v1314
    %v1416 = vpop.f32.mrb[0].mxu0
    %v1417 = vadd.f32 %v566, %v1416
    %v1418 = vpop.f32.mrb[0].mxu0
    %v1419 = vpop.f32.mrb[0].mxu0
    %v1420 = vadd.f32 %v566, %v1419
    %v1421 = vpop.f32.mrb[0].mxu0
    %1422 = vmatprep.mubr.bf16.mxu0 %v1317
    %1423 = vmatmul.mubr.bf16.gmra.mrb[0].mxu0 %v1316
    %v1424 = vpop.f32.mrb[0].mxu0
    %v1425 = vadd.f32 %v566, %v1424
    %v1426 = vpop.f32.mrb[0].mxu0
    %v1427 = vpop.f32.mrb[0].mxu0
    %v1428 = vadd.f32 %v566, %v1427
    %v1429 = vpop.f32.mrb[0].mxu0
    %1430 = vmatprep.mubr.bf16.mxu0 %v1319
    %1431 = vmatmul.mubr.bf16.gmra.mrb[0].mxu0 %v1318
    %v1432 = vpop.f32.mrb[0].mxu0
    %v1433 = vadd.f32 %v566, %v1432
    %v1434 = vpop.f32.mrb[0].mxu0
    %v1435 = vpop.f32.mrb[0].mxu0
    %v1436 = vadd.f32 %v566, %v1435
    %v1437 = vpop.f32.mrb[0].mxu0
    %1438 = vmatprep.mubr.bf16.mxu0 %v1321
    %1439 = vmatmul.mubr.bf16.gmra.mrb[0].mxu0 %v1320
    %v1440 = vpop.f32.mrb[0].mxu0
    %v1441 = vadd.f32 %v566, %v1440
    %v1442 = vpop.f32.mrb[0].mxu0
    %v1443 = vpop.f32.mrb[0].mxu0
    %v1444 = vadd.f32 %v566, %v1443
    %v1445 = vpop.f32.mrb[0].mxu0
    %1446 = vmatprep.mubr.bf16.mxu0 %v1323
    %1447 = vmatmul.mubr.bf16.gmra.mrb[0].mxu0 %v1322
    %v1448 = vpop.f32.mrb[0].mxu0
    %v1449 = vadd.f32 %v566, %v1448
    %v1450 = vpop.f32.mrb[0].mxu0
    %v1451 = vpop.f32.mrb[0].mxu0
    %v1452 = vadd.f32 %v566, %v1451
    %v1453 = vpop.f32.mrb[0].mxu0
    %1454 = vmatprep.mubr.bf16.mxu0 %v1325
    %1455 = vmatmul.mubr.bf16.gmra.mrb[0].mxu0 %v1324
    %v1456 = vpop.f32.mrb[0].mxu0
    %v1457 = vadd.f32 %v566, %v1456
    %v1458 = vpop.f32.mrb[0].mxu0
    %v1459 = vpop.f32.mrb[0].mxu0
    %v1460 = vadd.f32 %v566, %v1459
    %v1461 = vpop.f32.mrb[0].mxu0
    %1462 = vmatprep.mubr.bf16.mxu0 %v1327
    %1463 = vmatmul.mubr.bf16.gmra.mrb[0].mxu0 %v1326
    %v1464 = vpop.f32.mrb[0].mxu0
    %v1465 = vadd.f32 %v566, %v1464
    %v1466 = vpop.f32.mrb[0].mxu0
    %v1467 = vpop.f32.mrb[0].mxu0
    %v1468 = vadd.f32 %v566, %v1467
    %v1469 = vpop.f32.mrb[0].mxu0
    %1470 = vmatprep.mubr.bf16.mxu0 %v1329
    %1471 = vmatmul.mubr.bf16.gmra.mrb[0].mxu0 %v1328
    %v1472 = vpop.f32.mrb[0].mxu0
    %v1473 = vadd.f32 %v566, %v1472
    %v1474 = vpop.f32.mrb[0].mxu0
    %v1475 = vpop.f32.mrb[0].mxu0
    %v1476 = vadd.f32 %v566, %v1475
    %v1477 = vpop.f32.mrb[0].mxu0
    %1478 = vmatprep.mubr.bf16.mxu0 %v1331
    %1479 = vmatmul.mubr.bf16.gmra.mrb[0].mxu0 %v1330
    %v1480 = vpop.f32.mrb[0].mxu0
    %v1481 = vadd.f32 %v566, %v1480
    %v1482 = vpop.f32.mrb[0].mxu0
    %v1483 = vpop.f32.mrb[0].mxu0
    %v1484 = vadd.f32 %v566, %v1483
    %v1485 = vpop.f32.mrb[0].mxu0
    %1486 = vmatprep.mubr.bf16.mxu0 %v1333
    %1487 = vmatmul.mubr.bf16.gmra.mrb[0].mxu0 %v1332
    %v1488 = vpop.f32.mrb[0].mxu0
    %v1489 = vadd.f32 %v566, %v1488
    %v1490 = vpop.f32.mrb[0].mxu0
    %v1491 = vpop.f32.mrb[0].mxu0
    %v1492 = vadd.f32 %v566, %v1491
    %v1493 = vpop.f32.mrb[0].mxu0
    %1494 = vdwg.mxu0
    %v1495 = vmax.f32 %v1369, 0.0
    %v1496 = vmax.f32 %v1372, 0.0
    %v1497 = vmax.f32 %v1377, 0.0
    %v1498 = vmax.f32 %v1380, 0.0
    %v1499 = vmax.f32 %v1385, 0.0
    %v1500 = vmax.f32 %v1388, 0.0
    %v1501 = vmax.f32 %v1393, 0.0
    %v1502 = vmax.f32 %v1396, 0.0
    %v1503 = vmax.f32 %v1401, 0.0
    %v1504 = vmax.f32 %v1404, 0.0
    %v1505 = vmax.f32 %v1409, 0.0
    %v1506 = vmax.f32 %v1412, 0.0
    %v1507 = vmax.f32 %v1417, 0.0
    %v1508 = vmax.f32 %v1420, 0.0
    %v1509 = vmax.f32 %v1425, 0.0
    %v1510 = vmax.f32 %v1428, 0.0
    %v1511 = vmax.f32 %v1433, 0.0
    %v1512 = vmax.f32 %v1436, 0.0
    %v1513 = vmax.f32 %v1441, 0.0
    %v1514 = vmax.f32 %v1444, 0.0
    %v1515 = vmax.f32 %v1449, 0.0
    %v1516 = vmax.f32 %v1452, 0.0
    %v1517 = vmax.f32 %v1457, 0.0
    %v1518 = vmax.f32 %v1460, 0.0
    %v1519 = vmax.f32 %v1465, 0.0
    %v1520 = vmax.f32 %v1468, 0.0
    %v1521 = vmax.f32 %v1473, 0.0
    %v1522 = vmax.f32 %v1476, 0.0
    %v1523 = vmax.f32 %v1481, 0.0
    %v1524 = vmax.f32 %v1484, 0.0
    %v1525 = vmax.f32 %v1489, 0.0
    %v1526 = vmax.f32 %v1492, 0.0
    %v1527 = vpack.c.bf16 %v1496, %v1495
    %v1528 = vpack.c.bf16 %v1498, %v1497
    %v1529 = vpack.c.bf16 %v1500, %v1499
    %v1530 = vpack.c.bf16 %v1502, %v1501
    %v1531 = vpack.c.bf16 %v1504, %v1503
    %v1532 = vpack.c.bf16 %v1506, %v1505
    %v1533 = vpack.c.bf16 %v1508, %v1507
    %v1534 = vpack.c.bf16 %v1510, %v1509
    %v1535 = vpack.c.bf16 %v1512, %v1511
    %v1536 = vpack.c.bf16 %v1514, %v1513
    %v1537 = vpack.c.bf16 %v1516, %v1515
    %v1538 = vpack.c.bf16 %v1518, %v1517
    %v1539 = vpack.c.bf16 %v1520, %v1519
    %v1540 = vpack.c.bf16 %v1522, %v1521
    %v1541 = vpack.c.bf16 %v1524, %v1523
    %v1542 = vpack.c.bf16 %v1526, %v1525
    %v1543 = vld [vmem:[%s7] sm:$0xf]
    %v1544 = vld [vmem:[%s7 + $0x4] sm:$0xf]
    %v1545 = vld [vmem:[%s7 + $0x8] sm:$0xf]
    %v1546 = vld [vmem:[%s7 + $0xc] sm:$0xf]
    %v1547 = vld [vmem:[%s7 + $0x10] sm:$0xf]
    %v1548 = vld [vmem:[%s7 + $0x14] sm:$0xf]
    %v1549 = vld [vmem:[%s7 + $0x18] sm:$0xf]
    %v1550 = vld [vmem:[%s7 + $0x1c] sm:$0xf]
    %v1551 = vld [vmem:[%s7 + $0x20] sm:$0xf]
    %v1552 = vld [vmem:[%s7 + $0x24] sm:$0xf]
    %v1553 = vld [vmem:[%s7 + $0x28] sm:$0xf]
    %v1554 = vld [vmem:[%s7 + $0x2c] sm:$0xf]
    %v1555 = vld [vmem:[%s7 + $0x30] sm:$0xf]
    %v1556 = vld [vmem:[%s7 + $0x34] sm:$0xf]
    %v1557 = vld [vmem:[%s7 + $0x38] sm:$0xf]
    %v1558 = vld [vmem:[%s7 + $0x3c] sm:$0xf]
    %v1559 = vld [vmem:[%s8] sm:$0x1]
    %v1561 = vlaneseq
    %v1562 = vshrl.u32 %v1561, 7
    %v1563 = vsub.s32 0, %v1562
    %v1564 = vrot.slane %v1559, %v1563
    %v1582 = vunpack.c.l.b16 %v1543
    %v1583 = vunpack.c.l.b16 %v1544
    %v1584 = vunpack.c.l.b16 %v1545
    %v1585 = vunpack.c.l.b16 %v1546
    %v1586 = vunpack.c.l.b16 %v1547
    %v1587 = vunpack.c.l.b16 %v1548
    %v1588 = vunpack.c.l.b16 %v1549
    %v1589 = vunpack.c.l.b16 %v1550
    %v1590 = vunpack.c.l.b16 %v1551
    %v1591 = vunpack.c.l.b16 %v1552
    %v1592 = vunpack.c.l.b16 %v1553
    %v1593 = vunpack.c.l.b16 %v1554
    %v1594 = vunpack.c.l.b16 %v1555
    %v1595 = vunpack.c.l.b16 %v1556
    %v1596 = vunpack.c.l.b16 %v1557
    %v1597 = vunpack.c.l.b16 %v1558
    %v1598 = vpack.c.b16 %v1583, %v1582
    %v1599 = vpack.c.b16 %v1585, %v1584
    %v1600 = vpack.c.b16 %v1587, %v1586
    %v1601 = vpack.c.b16 %v1589, %v1588
    %v1602 = vpack.c.b16 %v1591, %v1590
    %v1603 = vpack.c.b16 %v1593, %v1592
    %v1604 = vpack.c.b16 %v1595, %v1594
    %v1605 = vpack.c.b16 %v1597, %v1596
    %1614 = vmatprep.subr.bf16.mxu0 0
    %1615 = vmatpush1.bf16.msra.mxu0 %v1598
    %1616 = vmatprep.subr.bf16.mxu0 0
    %1617 = vmatpush1.bf16.msra.mxu0 %v1599
    %1618 = vmatprep.subr.bf16.mxu0 0
    %1619 = vmatpush1.bf16.msra.mxu0 %v1600
    %1620 = vmatprep.subr.bf16.mxu0 0
    %1621 = vmatpush1.bf16.msra.mxu0 %v1601
    %1622 = vmatprep.subr.bf16.mxu0 0
    %1623 = vmatpush1.bf16.msra.mxu0 %v1602
    %1624 = vmatprep.subr.bf16.mxu0 0
    %1625 = vmatpush1.bf16.msra.mxu0 %v1603
    %1626 = vmatprep.subr.bf16.mxu0 0
    %1627 = vmatpush1.bf16.msra.mxu0 %v1604
    %1628 = vmatprep.subr.bf16.mxu0 0
    %1629 = vmatpush1.bf16.msra.mxu0 %v1605
    %1630 = vmatprep.subr.bf16.mxu0 0
    %1631 = vmatpush1.bf16.msra.mxu0 0
    %1632 = vmatprep.subr.bf16.mxu0 0
    %1633 = vmatpush1.bf16.msra.mxu0 0
    %1634 = vmatprep.subr.bf16.mxu0 0
    %1635 = vmatpush1.bf16.msra.mxu0 0
    %1636 = vmatprep.subr.bf16.mxu0 0
    %1637 = vmatpush1.bf16.msra.mxu0 0
    %1638 = vmatprep.subr.bf16.mxu0 0
    %1639 = vmatpush1.bf16.msra.mxu0 0
    %1640 = vmatprep.subr.bf16.mxu0 0
    %1641 = vmatpush1.bf16.msra.mxu0 0
    %1642 = vmatprep.subr.bf16.mxu0 0
    %1643 = vmatpush1.bf16.msra.mxu0 0
    %1644 = vmatprep.subr.bf16.mxu0 0
    %1645 = vmatpush1.bf16.msra.mxu0 0
    %1646 = vmatprep.mubr.bf16.mxu0 0
    %1647 = vmatmul.mubr.bf16.gmra.mrb[0].mxu0 %v1527
    %v1648 = vpop.f32.mrb[0].mxu0
    %v1649 = vadd.f32 %v1564, %v1648
    %v1650 = vpop.f32.mrb[0].mxu0
    %v1651 = vpop.f32.mrb[0].mxu0
    %v1652 = vadd.f32 %v1564, %v1651
    %v1653 = vpop.f32.mrb[0].mxu0
    %1654 = vmatprep.mubr.bf16.mxu0 0
    %1655 = vmatmul.mubr.bf16.gmra.mrb[0].mxu0 %v1528
    %v1656 = vpop.f32.mrb[0].mxu0
    %v1657 = vadd.f32 %v1564, %v1656
    %v1658 = vpop.f32.mrb[0].mxu0
    %v1659 = vpop.f32.mrb[0].mxu0
    %v1660 = vadd.f32 %v1564, %v1659
    %v1661 = vpop.f32.mrb[0].mxu0
    %1662 = vmatprep.mubr.bf16.mxu0 0
    %1663 = vmatmul.mubr.bf16.gmra.mrb[0].mxu0 %v1529
    %v1664 = vpop.f32.mrb[0].mxu0
    %v1665 = vadd.f32 %v1564, %v1664
    %v1666 = vpop.f32.mrb[0].mxu0
    %v1667 = vpop.f32.mrb[0].mxu0
    %v1668 = vadd.f32 %v1564, %v1667
    %v1669 = vpop.f32.mrb[0].mxu0
    %1670 = vmatprep.mubr.bf16.mxu0 0
    %1671 = vmatmul.mubr.bf16.gmra.mrb[0].mxu0 %v1530
    %v1672 = vpop.f32.mrb[0].mxu0
    %v1673 = vadd.f32 %v1564, %v1672
    %v1674 = vpop.f32.mrb[0].mxu0
    %v1675 = vpop.f32.mrb[0].mxu0
    %v1676 = vadd.f32 %v1564, %v1675
    %v1677 = vpop.f32.mrb[0].mxu0
    %1678 = vmatprep.mubr.bf16.mxu0 0
    %1679 = vmatmul.mubr.bf16.gmra.mrb[0].mxu0 %v1531
    %v1680 = vpop.f32.mrb[0].mxu0
    %v1681 = vadd.f32 %v1564, %v1680
    %v1682 = vpop.f32.mrb[0].mxu0
    %v1683 = vpop.f32.mrb[0].mxu0
    %v1684 = vadd.f32 %v1564, %v1683
    %v1685 = vpop.f32.mrb[0].mxu0
    %1686 = vmatprep.mubr.bf16.mxu0 0
    %1687 = vmatmul.mubr.bf16.gmra.mrb[0].mxu0 %v1532
    %v1688 = vpop.f32.mrb[0].mxu0
    %v1689 = vadd.f32 %v1564, %v1688
    %v1690 = vpop.f32.mrb[0].mxu0
    %v1691 = vpop.f32.mrb[0].mxu0
    %v1692 = vadd.f32 %v1564, %v1691
    %v1693 = vpop.f32.mrb[0].mxu0
    %1694 = vmatprep.mubr.bf16.mxu0 0
    %1695 = vmatmul.mubr.bf16.gmra.mrb[0].mxu0 %v1533
    %v1696 = vpop.f32.mrb[0].mxu0
    %v1697 = vadd.f32 %v1564, %v1696
    %v1698 = vpop.f32.mrb[0].mxu0
    %v1699 = vpop.f32.mrb[0].mxu0
    %v1700 = vadd.f32 %v1564, %v1699
    %v1701 = vpop.f32.mrb[0].mxu0
    %1702 = vmatprep.mubr.bf16.mxu0 0
    %1703 = vmatmul.mubr.bf16.gmra.mrb[0].mxu0 %v1534
    %v1704 = vpop.f32.mrb[0].mxu0
    %v1705 = vadd.f32 %v1564, %v1704
    %v1706 = vpop.f32.mrb[0].mxu0
    %v1707 = vpop.f32.mrb[0].mxu0
    %v1708 = vadd.f32 %v1564, %v1707
    %v1709 = vpop.f32.mrb[0].mxu0
    %1710 = vmatprep.mubr.bf16.mxu0 0
    %1711 = vmatmul.mubr.bf16.gmra.mrb[0].mxu0 %v1535
    %v1712 = vpop.f32.mrb[0].mxu0
    %v1713 = vadd.f32 %v1564, %v1712
    %v1714 = vpop.f32.mrb[0].mxu0
    %v1715 = vpop.f32.mrb[0].mxu0
    %v1716 = vadd.f32 %v1564, %v1715
    %v1717 = vpop.f32.mrb[0].mxu0
    %1718 = vmatprep.mubr.bf16.mxu0 0
    %1719 = vmatmul.mubr.bf16.gmra.mrb[0].mxu0 %v1536
    %v1720 = vpop.f32.mrb[0].mxu0
    %v1721 = vadd.f32 %v1564, %v1720
    %v1722 = vpop.f32.mrb[0].mxu0
    %v1723 = vpop.f32.mrb[0].mxu0
    %v1724 = vadd.f32 %v1564, %v1723
    %v1725 = vpop.f32.mrb[0].mxu0
    %1726 = vmatprep.mubr.bf16.mxu0 0
    %1727 = vmatmul.mubr.bf16.gmra.mrb[0].mxu0 %v1537
    %v1728 = vpop.f32.mrb[0].mxu0
    %v1729 = vadd.f32 %v1564, %v1728
    %v1730 = vpop.f32.mrb[0].mxu0
    %v1731 = vpop.f32.mrb[0].mxu0
    %v1732 = vadd.f32 %v1564, %v1731
    %v1733 = vpop.f32.mrb[0].mxu0
    %1734 = vmatprep.mubr.bf16.mxu0 0
    %1735 = vmatmul.mubr.bf16.gmra.mrb[0].mxu0 %v1538
    %v1736 = vpop.f32.mrb[0].mxu0
    %v1737 = vadd.f32 %v1564, %v1736
    %v1738 = vpop.f32.mrb[0].mxu0
    %v1739 = vpop.f32.mrb[0].mxu0
    %v1740 = vadd.f32 %v1564, %v1739
    %v1741 = vpop.f32.mrb[0].mxu0
    %1742 = vmatprep.mubr.bf16.mxu0 0
    %1743 = vmatmul.mubr.bf16.gmra.mrb[0].mxu0 %v1539
    %v1744 = vpop.f32.mrb[0].mxu0
    %v1745 = vadd.f32 %v1564, %v1744
    %v1746 = vpop.f32.mrb[0].mxu0
    %v1747 = vpop.f32.mrb[0].mxu0
    %v1748 = vadd.f32 %v1564, %v1747
    %v1749 = vpop.f32.mrb[0].mxu0
    %1750 = vmatprep.mubr.bf16.mxu0 0
    %1751 = vmatmul.mubr.bf16.gmra.mrb[0].mxu0 %v1540
    %v1752 = vpop.f32.mrb[0].mxu0
    %v1753 = vadd.f32 %v1564, %v1752
    %v1754 = vpop.f32.mrb[0].mxu0
    %v1755 = vpop.f32.mrb[0].mxu0
    %v1756 = vadd.f32 %v1564, %v1755
    %v1757 = vpop.f32.mrb[0].mxu0
    %1758 = vmatprep.mubr.bf16.mxu0 0
    %1759 = vmatmul.mubr.bf16.gmra.mrb[0].mxu0 %v1541
    %v1760 = vpop.f32.mrb[0].mxu0
    %v1761 = vadd.f32 %v1564, %v1760
    %v1762 = vpop.f32.mrb[0].mxu0
    %v1763 = vpop.f32.mrb[0].mxu0
    %v1764 = vadd.f32 %v1564, %v1763
    %v1765 = vpop.f32.mrb[0].mxu0
    %1766 = vmatprep.mubr.bf16.mxu0 0
    %1767 = vmatmul.mubr.bf16.gmra.mrb[0].mxu0 %v1542
    %v1768 = vpop.f32.mrb[0].mxu0
    %v1769 = vadd.f32 %v1564, %v1768
    %v1770 = vpop.f32.mrb[0].mxu0
    %v1771 = vpop.f32.mrb[0].mxu0
    %v1772 = vadd.f32 %v1564, %v1771
    %v1773 = vpop.f32.mrb[0].mxu0
    %1774 = vdwg.mxu0
    %v1775 = vmax.f32 %v1649, 0.0
    %v1776 = vmax.f32 %v1652, 0.0
    %v1777 = vmax.f32 %v1657, 0.0
    %v1778 = vmax.f32 %v1660, 0.0
    %v1779 = vmax.f32 %v1665, 0.0
    %v1780 = vmax.f32 %v1668, 0.0
    %v1781 = vmax.f32 %v1673, 0.0
    %v1782 = vmax.f32 %v1676, 0.0
    %v1783 = vmax.f32 %v1681, 0.0
    %v1784 = vmax.f32 %v1684, 0.0
    %v1785 = vmax.f32 %v1689, 0.0
    %v1786 = vmax.f32 %v1692, 0.0
    %v1787 = vmax.f32 %v1697, 0.0
    %v1788 = vmax.f32 %v1700, 0.0
    %v1789 = vmax.f32 %v1705, 0.0
    %v1790 = vmax.f32 %v1708, 0.0
    %v1791 = vmax.f32 %v1713, 0.0
    %v1792 = vmax.f32 %v1716, 0.0
    %v1793 = vmax.f32 %v1721, 0.0
    %v1794 = vmax.f32 %v1724, 0.0
    %v1795 = vmax.f32 %v1729, 0.0
    %v1796 = vmax.f32 %v1732, 0.0
    %v1797 = vmax.f32 %v1737, 0.0
    %v1798 = vmax.f32 %v1740, 0.0
    %v1799 = vmax.f32 %v1745, 0.0
    %v1800 = vmax.f32 %v1748, 0.0
    %v1801 = vmax.f32 %v1753, 0.0
    %v1802 = vmax.f32 %v1756, 0.0
    %v1803 = vmax.f32 %v1761, 0.0
    %v1804 = vmax.f32 %v1764, 0.0
    %v1805 = vmax.f32 %v1769, 0.0
    %v1806 = vmax.f32 %v1772, 0.0
    %v1807 = vpack.c.bf16 %v1776, %v1775
    %v1808 = vpack.c.bf16 %v1778, %v1777
    %v1809 = vpack.c.bf16 %v1780, %v1779
    %v1810 = vpack.c.bf16 %v1782, %v1781
    %v1811 = vpack.c.bf16 %v1784, %v1783
    %v1812 = vpack.c.bf16 %v1786, %v1785
    %v1813 = vpack.c.bf16 %v1788, %v1787
    %v1814 = vpack.c.bf16 %v1790, %v1789
    %v1815 = vpack.c.bf16 %v1792, %v1791
    %v1816 = vpack.c.bf16 %v1794, %v1793
    %v1817 = vpack.c.bf16 %v1796, %v1795
    %v1818 = vpack.c.bf16 %v1798, %v1797
    %v1819 = vpack.c.bf16 %v1800, %v1799
    %v1820 = vpack.c.bf16 %v1802, %v1801
    %v1821 = vpack.c.bf16 %v1804, %v1803
    %v1822 = vpack.c.bf16 %v1806, %v1805
    %v1823 = vld [vmem:[#allocation5] sm:$0xf]
    %v1824 = vld [vmem:[#allocation5 + $0x4] sm:$0xf]
    %v1825 = vld [vmem:[#allocation5 + $0x8] sm:$0xf]
    %v1826 = vld [vmem:[#allocation5 + $0xc] sm:$0xf]
    %v1827 = vld [vmem:[#allocation5 + $0x10] sm:$0xf]
    %v1828 = vld [vmem:[#allocation5 + $0x14] sm:$0xf]
    %v1829 = vld [vmem:[#allocation5 + $0x18] sm:$0xf]
    %v1830 = vld [vmem:[#allocation5 + $0x1c] sm:$0xf]
    %v1831 = vld [vmem:[#allocation5 + $0x20] sm:$0xf]
    %v1832 = vld [vmem:[#allocation5 + $0x24] sm:$0xf]
    %v1833 = vld [vmem:[#allocation5 + $0x28] sm:$0xf]
    %v1834 = vld [vmem:[#allocation5 + $0x2c] sm:$0xf]
    %v1835 = vld [vmem:[#allocation5 + $0x30] sm:$0xf]
    %v1836 = vld [vmem:[#allocation5 + $0x34] sm:$0xf]
    %v1837 = vld [vmem:[#allocation5 + $0x38] sm:$0xf]
    %v1838 = vld [vmem:[#allocation5 + $0x3c] sm:$0xf]
    %v1839 = vld [vmem:[%s10] sm:$0x1]
    %v1841 = vlaneseq
    %v1842 = vshrl.u32 %v1841, 7
    %v1843 = vsub.s32 0, %v1842
    %v1844 = vrot.slane %v1839, %v1843
    %v1862 = vunpack.c.l.b16 %v1823
    %v1863 = vunpack.c.l.b16 %v1824
    %v1864 = vunpack.c.l.b16 %v1825
    %v1865 = vunpack.c.l.b16 %v1826
    %v1866 = vunpack.c.l.b16 %v1827
    %v1867 = vunpack.c.l.b16 %v1828
    %v1868 = vunpack.c.l.b16 %v1829
    %v1869 = vunpack.c.l.b16 %v1830
    %v1870 = vunpack.c.l.b16 %v1831
    %v1871 = vunpack.c.l.b16 %v1832
    %v1872 = vunpack.c.l.b16 %v1833
    %v1873 = vunpack.c.l.b16 %v1834
    %v1874 = vunpack.c.l.b16 %v1835
    %v1875 = vunpack.c.l.b16 %v1836
    %v1876 = vunpack.c.l.b16 %v1837
    %v1877 = vunpack.c.l.b16 %v1838
    %v1878 = vpack.c.b16 %v1863, %v1862
    %v1879 = vpack.c.b16 %v1865, %v1864
    %v1880 = vpack.c.b16 %v1867, %v1866
    %v1881 = vpack.c.b16 %v1869, %v1868
    %v1882 = vpack.c.b16 %v1871, %v1870
    %v1883 = vpack.c.b16 %v1873, %v1872
    %v1884 = vpack.c.b16 %v1875, %v1874
    %v1885 = vpack.c.b16 %v1877, %v1876
    %1894 = vmatprep.subr.bf16.mxu0 0
    %1895 = vmatpush1.bf16.msra.mxu0 %v1878
    %1896 = vmatprep.subr.bf16.mxu0 0
    %1897 = vmatpush1.bf16.msra.mxu0 %v1879
    %1898 = vmatprep.subr.bf16.mxu0 0
    %1899 = vmatpush1.bf16.msra.mxu0 %v1880
    %1900 = vmatprep.subr.bf16.mxu0 0
    %1901 = vmatpush1.bf16.msra.mxu0 %v1881
    %1902 = vmatprep.subr.bf16.mxu0 0
    %1903 = vmatpush1.bf16.msra.mxu0 %v1882
    %1904 = vmatprep.subr.bf16.mxu0 0
    %1905 = vmatpush1.bf16.msra.mxu0 %v1883
    %1906 = vmatprep.subr.bf16.mxu0 0
    %1907 = vmatpush1.bf16.msra.mxu0 %v1884
    %1908 = vmatprep.subr.bf16.mxu0 0
    %1909 = vmatpush1.bf16.msra.mxu0 %v1885
    %1910 = vmatprep.subr.bf16.mxu0 0
    %1911 = vmatpush1.bf16.msra.mxu0 0
    %1912 = vmatprep.subr.bf16.mxu0 0
    %1913 = vmatpush1.bf16.msra.mxu0 0
    %1914 = vmatprep.subr.bf16.mxu0 0
    %1915 = vmatpush1.bf16.msra.mxu0 0
    %1916 = vmatprep.subr.bf16.mxu0 0
    %1917 = vmatpush1.bf16.msra.mxu0 0
    %1918 = vmatprep.subr.bf16.mxu0 0
    %1919 = vmatpush1.bf16.msra.mxu0 0
    %1920 = vmatprep.subr.bf16.mxu0 0
    %1921 = vmatpush1.bf16.msra.mxu0 0
    %1922 = vmatprep.subr.bf16.mxu0 0
    %1923 = vmatpush1.bf16.msra.mxu0 0
    %1924 = vmatprep.subr.bf16.mxu0 0
    %1925 = vmatpush1.bf16.msra.mxu0 0
    %1926 = vmatprep.mubr.bf16.mxu0 0
    %1927 = vmatmul.mubr.bf16.gmra.mrb[0].mxu0 %v1807
    %v1928 = vpop.f32.mrb[0].mxu0
    %v1929 = vadd.f32 %v1844, %v1928
    %v1930 = vpop.f32.mrb[0].mxu0
    %v1931 = vpop.f32.mrb[0].mxu0
    %v1932 = vadd.f32 %v1844, %v1931
    %v1933 = vpop.f32.mrb[0].mxu0
    %1934 = vmatprep.mubr.bf16.mxu0 0
    %1935 = vmatmul.mubr.bf16.gmra.mrb[0].mxu0 %v1808
    %v1936 = vpop.f32.mrb[0].mxu0
    %v1937 = vadd.f32 %v1844, %v1936
    %v1938 = vpop.f32.mrb[0].mxu0
    %v1939 = vpop.f32.mrb[0].mxu0
    %v1940 = vadd.f32 %v1844, %v1939
    %v1941 = vpop.f32.mrb[0].mxu0
    %1942 = vmatprep.mubr.bf16.mxu0 0
    %1943 = vmatmul.mubr.bf16.gmra.mrb[0].mxu0 %v1809
    %v1944 = vpop.f32.mrb[0].mxu0
    %v1945 = vadd.f32 %v1844, %v1944
    %v1946 = vpop.f32.mrb[0].mxu0
    %v1947 = vpop.f32.mrb[0].mxu0
    %v1948 = vadd.f32 %v1844, %v1947
    %v1949 = vpop.f32.mrb[0].mxu0
    %1950 = vmatprep.mubr.bf16.mxu0 0
    %1951 = vmatmul.mubr.bf16.gmra.mrb[0].mxu0 %v1810
    %v1952 = vpop.f32.mrb[0].mxu0
    %v1953 = vadd.f32 %v1844, %v1952
    %v1954 = vpop.f32.mrb[0].mxu0
    %v1955 = vpop.f32.mrb[0].mxu0
    %v1956 = vadd.f32 %v1844, %v1955
    %v1957 = vpop.f32.mrb[0].mxu0
    %1958 = vmatprep.mubr.bf16.mxu0 0
    %1959 = vmatmul.mubr.bf16.gmra.mrb[0].mxu0 %v1811
    %v1960 = vpop.f32.mrb[0].mxu0
    %v1961 = vadd.f32 %v1844, %v1960
    %v1962 = vpop.f32.mrb[0].mxu0
    %v1963 = vpop.f32.mrb[0].mxu0
    %v1964 = vadd.f32 %v1844, %v1963
    %v1965 = vpop.f32.mrb[0].mxu0
    %1966 = vmatprep.mubr.bf16.mxu0 0
    %1967 = vmatmul.mubr.bf16.gmra.mrb[0].mxu0 %v1812
    %v1968 = vpop.f32.mrb[0].mxu0
    %v1969 = vadd.f32 %v1844, %v1968
    %v1970 = vpop.f32.mrb[0].mxu0
    %v1971 = vpop.f32.mrb[0].mxu0
    %v1972 = vadd.f32 %v1844, %v1971
    %v1973 = vpop.f32.mrb[0].mxu0
    %1974 = vmatprep.mubr.bf16.mxu0 0
    %1975 = vmatmul.mubr.bf16.gmra.mrb[0].mxu0 %v1813
    %v1976 = vpop.f32.mrb[0].mxu0
    %v1977 = vadd.f32 %v1844, %v1976
    %v1978 = vpop.f32.mrb[0].mxu0
    %v1979 = vpop.f32.mrb[0].mxu0
    %v1980 = vadd.f32 %v1844, %v1979
    %v1981 = vpop.f32.mrb[0].mxu0
    %1982 = vmatprep.mubr.bf16.mxu0 0
    %1983 = vmatmul.mubr.bf16.gmra.mrb[0].mxu0 %v1814
    %v1984 = vpop.f32.mrb[0].mxu0
    %v1985 = vadd.f32 %v1844, %v1984
    %v1986 = vpop.f32.mrb[0].mxu0
    %v1987 = vpop.f32.mrb[0].mxu0
    %v1988 = vadd.f32 %v1844, %v1987
    %v1989 = vpop.f32.mrb[0].mxu0
    %1990 = vmatprep.mubr.bf16.mxu0 0
    %1991 = vmatmul.mubr.bf16.gmra.mrb[0].mxu0 %v1815
    %v1992 = vpop.f32.mrb[0].mxu0
    %v1993 = vadd.f32 %v1844, %v1992
    %v1994 = vpop.f32.mrb[0].mxu0
    %v1995 = vpop.f32.mrb[0].mxu0
    %v1996 = vadd.f32 %v1844, %v1995
    %v1997 = vpop.f32.mrb[0].mxu0
    %1998 = vmatprep.mubr.bf16.mxu0 0
    %1999 = vmatmul.mubr.bf16.gmra.mrb[0].mxu0 %v1816
    %v2000 = vpop.f32.mrb[0].mxu0
    %v2001 = vadd.f32 %v1844, %v2000
    %v2002 = vpop.f32.mrb[0].mxu0
    %v2003 = vpop.f32.mrb[0].mxu0
    %v2004 = vadd.f32 %v1844, %v2003
    %v2005 = vpop.f32.mrb[0].mxu0
    %2006 = vmatprep.mubr.bf16.mxu0 0
    %2007 = vmatmul.mubr.bf16.gmra.mrb[0].mxu0 %v1817
    %v2008 = vpop.f32.mrb[0].mxu0
    %v2009 = vadd.f32 %v1844, %v2008
    %v2010 = vpop.f32.mrb[0].mxu0
    %v2011 = vpop.f32.mrb[0].mxu0
    %v2012 = vadd.f32 %v1844, %v2011
    %v2013 = vpop.f32.mrb[0].mxu0
    %2014 = vmatprep.mubr.bf16.mxu0 0
    %2015 = vmatmul.mubr.bf16.gmra.mrb[0].mxu0 %v1818
    %v2016 = vpop.f32.mrb[0].mxu0
    %v2017 = vadd.f32 %v1844, %v2016
    %v2018 = vpop.f32.mrb[0].mxu0
    %v2019 = vpop.f32.mrb[0].mxu0
    %v2020 = vadd.f32 %v1844, %v2019
    %v2021 = vpop.f32.mrb[0].mxu0
    %2022 = vmatprep.mubr.bf16.mxu0 0
    %2023 = vmatmul.mubr.bf16.gmra.mrb[0].mxu0 %v1819
    %v2024 = vpop.f32.mrb[0].mxu0
    %v2025 = vadd.f32 %v1844, %v2024
    %v2026 = vpop.f32.mrb[0].mxu0
    %v2027 = vpop.f32.mrb[0].mxu0
    %v2028 = vadd.f32 %v1844, %v2027
    %v2029 = vpop.f32.mrb[0].mxu0
    %2030 = vmatprep.mubr.bf16.mxu0 0
    %2031 = vmatmul.mubr.bf16.gmra.mrb[0].mxu0 %v1820
    %v2032 = vpop.f32.mrb[0].mxu0
    %v2033 = vadd.f32 %v1844, %v2032
    %v2034 = vpop.f32.mrb[0].mxu0
    %v2035 = vpop.f32.mrb[0].mxu0
    %v2036 = vadd.f32 %v1844, %v2035
    %v2037 = vpop.f32.mrb[0].mxu0
    %2038 = vmatprep.mubr.bf16.mxu0 0
    %2039 = vmatmul.mubr.bf16.gmra.mrb[0].mxu0 %v1821
    %v2040 = vpop.f32.mrb[0].mxu0
    %v2041 = vadd.f32 %v1844, %v2040
    %v2042 = vpop.f32.mrb[0].mxu0
    %v2043 = vpop.f32.mrb[0].mxu0
    %v2044 = vadd.f32 %v1844, %v2043
    %v2045 = vpop.f32.mrb[0].mxu0
    %2046 = vmatprep.mubr.bf16.mxu0 0
    %2047 = vmatmul.mubr.bf16.gmra.mrb[0].mxu0 %v1822
    %v2048 = vpop.f32.mrb[0].mxu0
    %v2049 = vadd.f32 %v1844, %v2048
    %v2050 = vpop.f32.mrb[0].mxu0
    %v2051 = vpop.f32.mrb[0].mxu0
    %v2052 = vadd.f32 %v1844, %v2051
    %v2053 = vpop.f32.mrb[0].mxu0
    %2054 = vdwg.mxu0
    %v2055 = vmax.f32 %v1929, 0.0
    %v2056 = vmax.f32 %v1932, 0.0
    %v2057 = vmax.f32 %v1937, 0.0
    %v2058 = vmax.f32 %v1940, 0.0
    %v2059 = vmax.f32 %v1945, 0.0
    %v2060 = vmax.f32 %v1948, 0.0
    %v2061 = vmax.f32 %v1953, 0.0
    %v2062 = vmax.f32 %v1956, 0.0
    %v2063 = vmax.f32 %v1961, 0.0
    %v2064 = vmax.f32 %v1964, 0.0
    %v2065 = vmax.f32 %v1969, 0.0
    %v2066 = vmax.f32 %v1972, 0.0
    %v2067 = vmax.f32 %v1977, 0.0
    %v2068 = vmax.f32 %v1980, 0.0
    %v2069 = vmax.f32 %v1985, 0.0
    %v2070 = vmax.f32 %v1988, 0.0
    %v2071 = vmax.f32 %v1993, 0.0
    %v2072 = vmax.f32 %v1996, 0.0
    %v2073 = vmax.f32 %v2001, 0.0
    %v2074 = vmax.f32 %v2004, 0.0
    %v2075 = vmax.f32 %v2009, 0.0
    %v2076 = vmax.f32 %v2012, 0.0
    %v2077 = vmax.f32 %v2017, 0.0
    %v2078 = vmax.f32 %v2020, 0.0
    %v2079 = vmax.f32 %v2025, 0.0
    %v2080 = vmax.f32 %v2028, 0.0
    %v2081 = vmax.f32 %v2033, 0.0
    %v2082 = vmax.f32 %v2036, 0.0
    %v2083 = vmax.f32 %v2041, 0.0
    %v2084 = vmax.f32 %v2044, 0.0
    %v2085 = vmax.f32 %v2049, 0.0
    %v2086 = vmax.f32 %v2052, 0.0
    %v2087 = vpack.c.bf16 %v2056, %v2055
    %v2088 = vpack.c.bf16 %v2058, %v2057
    %v2089 = vpack.c.bf16 %v2060, %v2059
    %v2090 = vpack.c.bf16 %v2062, %v2061
    %v2091 = vpack.c.bf16 %v2064, %v2063
    %v2092 = vpack.c.bf16 %v2066, %v2065
    %v2093 = vpack.c.bf16 %v2068, %v2067
    %v2094 = vpack.c.bf16 %v2070, %v2069
    %v2095 = vpack.c.bf16 %v2072, %v2071
    %v2096 = vpack.c.bf16 %v2074, %v2073
    %v2097 = vpack.c.bf16 %v2076, %v2075
    %v2098 = vpack.c.bf16 %v2078, %v2077
    %v2099 = vpack.c.bf16 %v2080, %v2079
    %v2100 = vpack.c.bf16 %v2082, %v2081
    %v2101 = vpack.c.bf16 %v2084, %v2083
    %v2102 = vpack.c.bf16 %v2086, %v2085
    %v2103 = vld [vmem:[#allocation7] sm:$0xf]
    %v2104 = vld [vmem:[#allocation7 + $0x4] sm:$0xf]
    %v2105 = vld [vmem:[#allocation7 + $0x8] sm:$0xf]
    %v2106 = vld [vmem:[#allocation7 + $0xc] sm:$0xf]
    %v2107 = vld [vmem:[#allocation7 + $0x10] sm:$0xf]
    %v2108 = vld [vmem:[#allocation7 + $0x14] sm:$0xf]
    %v2109 = vld [vmem:[#allocation7 + $0x18] sm:$0xf]
    %v2110 = vld [vmem:[#allocation7 + $0x1c] sm:$0xf]
    %v2111 = vld [vmem:[#allocation7 + $0x20] sm:$0xf]
    %v2112 = vld [vmem:[#allocation7 + $0x24] sm:$0xf]
    %v2113 = vld [vmem:[#allocation7 + $0x28] sm:$0xf]
    %v2114 = vld [vmem:[#allocation7 + $0x2c] sm:$0xf]
    %v2115 = vld [vmem:[#allocation7 + $0x30] sm:$0xf]
    %v2116 = vld [vmem:[#allocation7 + $0x34] sm:$0xf]
    %v2117 = vld [vmem:[#allocation7 + $0x38] sm:$0xf]
    %v2118 = vld [vmem:[#allocation7 + $0x3c] sm:$0xf]
    %v2119 = vld [vmem:[%s12] sm:$0x1]
    %v2121 = vlaneseq
    %v2122 = vshrl.u32 %v2121, 7
    %v2123 = vsub.s32 0, %v2122
    %v2124 = vrot.slane %v2119, %v2123
    %v2142 = vunpack.c.l.b16 %v2103
    %v2143 = vunpack.c.l.b16 %v2104
    %v2144 = vunpack.c.l.b16 %v2105
    %v2145 = vunpack.c.l.b16 %v2106
    %v2146 = vunpack.c.l.b16 %v2107
    %v2147 = vunpack.c.l.b16 %v2108
    %v2148 = vunpack.c.l.b16 %v2109
    %v2149 = vunpack.c.l.b16 %v2110
    %v2150 = vunpack.c.l.b16 %v2111
    %v2151 = vunpack.c.l.b16 %v2112
    %v2152 = vunpack.c.l.b16 %v2113
    %v2153 = vunpack.c.l.b16 %v2114
    %v2154 = vunpack.c.l.b16 %v2115
    %v2155 = vunpack.c.l.b16 %v2116
    %v2156 = vunpack.c.l.b16 %v2117
    %v2157 = vunpack.c.l.b16 %v2118
    %v2158 = vpack.c.b16 %v2143, %v2142
    %v2159 = vpack.c.b16 %v2145, %v2144
    %v2160 = vpack.c.b16 %v2147, %v2146
    %v2161 = vpack.c.b16 %v2149, %v2148
    %v2162 = vpack.c.b16 %v2151, %v2150
    %v2163 = vpack.c.b16 %v2153, %v2152
    %v2164 = vpack.c.b16 %v2155, %v2154
    %v2165 = vpack.c.b16 %v2157, %v2156
    %2174 = vmatprep.subr.bf16.mxu0 0
    %2175 = vmatpush1.bf16.msra.mxu0 %v2158
    %2176 = vmatprep.subr.bf16.mxu0 0
    %2177 = vmatpush1.bf16.msra.mxu0 %v2159
    %2178 = vmatprep.subr.bf16.mxu0 0
    %2179 = vmatpush1.bf16.msra.mxu0 %v2160
    %2180 = vmatprep.subr.bf16.mxu0 0
    %2181 = vmatpush1.bf16.msra.mxu0 %v2161
    %2182 = vmatprep.subr.bf16.mxu0 0
    %2183 = vmatpush1.bf16.msra.mxu0 %v2162
    %2184 = vmatprep.subr.bf16.mxu0 0
    %2185 = vmatpush1.bf16.msra.mxu0 %v2163
    %2186 = vmatprep.subr.bf16.mxu0 0
    %2187 = vmatpush1.bf16.msra.mxu0 %v2164
    %2188 = vmatprep.subr.bf16.mxu0 0
    %2189 = vmatpush1.bf16.msra.mxu0 %v2165
    %2190 = vmatprep.subr.bf16.mxu0 0
    %2191 = vmatpush1.bf16.msra.mxu0 0
    %2192 = vmatprep.subr.bf16.mxu0 0
    %2193 = vmatpush1.bf16.msra.mxu0 0
    %2194 = vmatprep.subr.bf16.mxu0 0
    %2195 = vmatpush1.bf16.msra.mxu0 0
    %2196 = vmatprep.subr.bf16.mxu0 0
    %2197 = vmatpush1.bf16.msra.mxu0 0
    %2198 = vmatprep.subr.bf16.mxu0 0
    %2199 = vmatpush1.bf16.msra.mxu0 0
    %2200 = vmatprep.subr.bf16.mxu0 0
    %2201 = vmatpush1.bf16.msra.mxu0 0
    %2202 = vmatprep.subr.bf16.mxu0 0
    %2203 = vmatpush1.bf16.msra.mxu0 0
    %2204 = vmatprep.subr.bf16.mxu0 0
    %2205 = vmatpush1.bf16.msra.mxu0 0
    %2206 = vmatprep.mubr.bf16.mxu0 0
    %2207 = vmatmul.mubr.bf16.gmra.mrb[0].mxu0 %v2087
    %v2208 = vpop.f32.mrb[0].mxu0
    %v2209 = vadd.f32 %v2124, %v2208
    %v2210 = vpop.f32.mrb[0].mxu0
    %v2211 = vpop.f32.mrb[0].mxu0
    %v2212 = vadd.f32 %v2124, %v2211
    %v2213 = vpop.f32.mrb[0].mxu0
    %2214 = vmatprep.mubr.bf16.mxu0 0
    %2215 = vmatmul.mubr.bf16.gmra.mrb[0].mxu0 %v2088
    %v2216 = vpop.f32.mrb[0].mxu0
    %v2217 = vadd.f32 %v2124, %v2216
    %v2218 = vpop.f32.mrb[0].mxu0
    %v2219 = vpop.f32.mrb[0].mxu0
    %v2220 = vadd.f32 %v2124, %v2219
    %v2221 = vpop.f32.mrb[0].mxu0
    %2222 = vmatprep.mubr.bf16.mxu0 0
    %2223 = vmatmul.mubr.bf16.gmra.mrb[0].mxu0 %v2089
    %v2224 = vpop.f32.mrb[0].mxu0
    %v2225 = vadd.f32 %v2124, %v2224
    %v2226 = vpop.f32.mrb[0].mxu0
    %v2227 = vpop.f32.mrb[0].mxu0
    %v2228 = vadd.f32 %v2124, %v2227
    %v2229 = vpop.f32.mrb[0].mxu0
    %2230 = vmatprep.mubr.bf16.mxu0 0
    %2231 = vmatmul.mubr.bf16.gmra.mrb[0].mxu0 %v2090
    %v2232 = vpop.f32.mrb[0].mxu0
    %v2233 = vadd.f32 %v2124, %v2232
    %v2234 = vpop.f32.mrb[0].mxu0
    %v2235 = vpop.f32.mrb[0].mxu0
    %v2236 = vadd.f32 %v2124, %v2235
    %v2237 = vpop.f32.mrb[0].mxu0
    %2238 = vmatprep.mubr.bf16.mxu0 0
    %2239 = vmatmul.mubr.bf16.gmra.mrb[0].mxu0 %v2091
    %v2240 = vpop.f32.mrb[0].mxu0
    %v2241 = vadd.f32 %v2124, %v2240
    %v2242 = vpop.f32.mrb[0].mxu0
    %v2243 = vpop.f32.mrb[0].mxu0
    %v2244 = vadd.f32 %v2124, %v2243
    %v2245 = vpop.f32.mrb[0].mxu0
    %2246 = vmatprep.mubr.bf16.mxu0 0
    %2247 = vmatmul.mubr.bf16.gmra.mrb[0].mxu0 %v2092
    %v2248 = vpop.f32.mrb[0].mxu0
    %v2249 = vadd.f32 %v2124, %v2248
    %v2250 = vpop.f32.mrb[0].mxu0
    %v2251 = vpop.f32.mrb[0].mxu0
    %v2252 = vadd.f32 %v2124, %v2251
    %v2253 = vpop.f32.mrb[0].mxu0
    %2254 = vmatprep.mubr.bf16.mxu0 0
    %2255 = vmatmul.mubr.bf16.gmra.mrb[0].mxu0 %v2093
    %v2256 = vpop.f32.mrb[0].mxu0
    %v2257 = vadd.f32 %v2124, %v2256
    %v2258 = vpop.f32.mrb[0].mxu0
    %v2259 = vpop.f32.mrb[0].mxu0
    %v2260 = vadd.f32 %v2124, %v2259
    %v2261 = vpop.f32.mrb[0].mxu0
    %2262 = vmatprep.mubr.bf16.mxu0 0
    %2263 = vmatmul.mubr.bf16.gmra.mrb[0].mxu0 %v2094
    %v2264 = vpop.f32.mrb[0].mxu0
    %v2265 = vadd.f32 %v2124, %v2264
    %v2266 = vpop.f32.mrb[0].mxu0
    %v2267 = vpop.f32.mrb[0].mxu0
    %v2268 = vadd.f32 %v2124, %v2267
    %v2269 = vpop.f32.mrb[0].mxu0
    %2270 = vmatprep.mubr.bf16.mxu0 0
    %2271 = vmatmul.mubr.bf16.gmra.mrb[0].mxu0 %v2095
    %v2272 = vpop.f32.mrb[0].mxu0
    %v2273 = vadd.f32 %v2124, %v2272
    %v2274 = vpop.f32.mrb[0].mxu0
    %v2275 = vpop.f32.mrb[0].mxu0
    %v2276 = vadd.f32 %v2124, %v2275
    %v2277 = vpop.f32.mrb[0].mxu0
    %2278 = vmatprep.mubr.bf16.mxu0 0
    %2279 = vmatmul.mubr.bf16.gmra.mrb[0].mxu0 %v2096
    %v2280 = vpop.f32.mrb[0].mxu0
    %v2281 = vadd.f32 %v2124, %v2280
    %v2282 = vpop.f32.mrb[0].mxu0
    %v2283 = vpop.f32.mrb[0].mxu0
    %v2284 = vadd.f32 %v2124, %v2283
    %v2285 = vpop.f32.mrb[0].mxu0
    %2286 = vmatprep.mubr.bf16.mxu0 0
    %2287 = vmatmul.mubr.bf16.gmra.mrb[0].mxu0 %v2097
    %v2288 = vpop.f32.mrb[0].mxu0
    %v2289 = vadd.f32 %v2124, %v2288
    %v2290 = vpop.f32.mrb[0].mxu0
    %v2291 = vpop.f32.mrb[0].mxu0
    %v2292 = vadd.f32 %v2124, %v2291
    %v2293 = vpop.f32.mrb[0].mxu0
    %2294 = vmatprep.mubr.bf16.mxu0 0
    %2295 = vmatmul.mubr.bf16.gmra.mrb[0].mxu0 %v2098
    %v2296 = vpop.f32.mrb[0].mxu0
    %v2297 = vadd.f32 %v2124, %v2296
    %v2298 = vpop.f32.mrb[0].mxu0
    %v2299 = vpop.f32.mrb[0].mxu0
    %v2300 = vadd.f32 %v2124, %v2299
    %v2301 = vpop.f32.mrb[0].mxu0
    %2302 = vmatprep.mubr.bf16.mxu0 0
    %2303 = vmatmul.mubr.bf16.gmra.mrb[0].mxu0 %v2099
    %v2304 = vpop.f32.mrb[0].mxu0
    %v2305 = vadd.f32 %v2124, %v2304
    %v2306 = vpop.f32.mrb[0].mxu0
    %v2307 = vpop.f32.mrb[0].mxu0
    %v2308 = vadd.f32 %v2124, %v2307
    %v2309 = vpop.f32.mrb[0].mxu0
    %2310 = vmatprep.mubr.bf16.mxu0 0
    %2311 = vmatmul.mubr.bf16.gmra.mrb[0].mxu0 %v2100
    %v2312 = vpop.f32.mrb[0].mxu0
    %v2313 = vadd.f32 %v2124, %v2312
    %v2314 = vpop.f32.mrb[0].mxu0
    %v2315 = vpop.f32.mrb[0].mxu0
    %v2316 = vadd.f32 %v2124, %v2315
    %v2317 = vpop.f32.mrb[0].mxu0
    %2318 = vmatprep.mubr.bf16.mxu0 0
    %2319 = vmatmul.mubr.bf16.gmra.mrb[0].mxu0 %v2101
    %v2320 = vpop.f32.mrb[0].mxu0
    %v2321 = vadd.f32 %v2124, %v2320
    %v2322 = vpop.f32.mrb[0].mxu0
    %v2323 = vpop.f32.mrb[0].mxu0
    %v2324 = vadd.f32 %v2124, %v2323
    %v2325 = vpop.f32.mrb[0].mxu0
    %2326 = vmatprep.mubr.bf16.mxu0 0
    %2327 = vmatmul.mubr.bf16.gmra.mrb[0].mxu0 %v2102
    %v2328 = vpop.f32.mrb[0].mxu0
    %v2329 = vadd.f32 %v2124, %v2328
    %v2330 = vpop.f32.mrb[0].mxu0
    %v2331 = vpop.f32.mrb[0].mxu0
    %v2332 = vadd.f32 %v2124, %v2331
    %v2333 = vpop.f32.mrb[0].mxu0
    %2334 = vdwg.mxu0
    %v2335 = vmax.f32 %v2209, 0.0
    %v2336 = vmax.f32 %v2212, 0.0
    %v2337 = vmax.f32 %v2217, 0.0
    %v2338 = vmax.f32 %v2220, 0.0
    %v2339 = vmax.f32 %v2225, 0.0
    %v2340 = vmax.f32 %v2228, 0.0
    %v2341 = vmax.f32 %v2233, 0.0
    %v2342 = vmax.f32 %v2236, 0.0
    %v2343 = vmax.f32 %v2241, 0.0
    %v2344 = vmax.f32 %v2244, 0.0
    %v2345 = vmax.f32 %v2249, 0.0
    %v2346 = vmax.f32 %v2252, 0.0
    %v2347 = vmax.f32 %v2257, 0.0
    %v2348 = vmax.f32 %v2260, 0.0
    %v2349 = vmax.f32 %v2265, 0.0
    %v2350 = vmax.f32 %v2268, 0.0
    %v2351 = vmax.f32 %v2273, 0.0
    %v2352 = vmax.f32 %v2276, 0.0
    %v2353 = vmax.f32 %v2281, 0.0
    %v2354 = vmax.f32 %v2284, 0.0
    %v2355 = vmax.f32 %v2289, 0.0
    %v2356 = vmax.f32 %v2292, 0.0
    %v2357 = vmax.f32 %v2297, 0.0
    %v2358 = vmax.f32 %v2300, 0.0
    %v2359 = vmax.f32 %v2305, 0.0
    %v2360 = vmax.f32 %v2308, 0.0
    %v2361 = vmax.f32 %v2313, 0.0
    %v2362 = vmax.f32 %v2316, 0.0
    %v2363 = vmax.f32 %v2321, 0.0
    %v2364 = vmax.f32 %v2324, 0.0
    %v2365 = vmax.f32 %v2329, 0.0
    %v2366 = vmax.f32 %v2332, 0.0
    %v2367 = vpack.c.bf16 %v2336, %v2335
    %v2368 = vpack.c.bf16 %v2338, %v2337
    %v2369 = vpack.c.bf16 %v2340, %v2339
    %v2370 = vpack.c.bf16 %v2342, %v2341
    %v2371 = vpack.c.bf16 %v2344, %v2343
    %v2372 = vpack.c.bf16 %v2346, %v2345
    %v2373 = vpack.c.bf16 %v2348, %v2347
    %v2374 = vpack.c.bf16 %v2350, %v2349
    %v2375 = vpack.c.bf16 %v2352, %v2351
    %v2376 = vpack.c.bf16 %v2354, %v2353
    %v2377 = vpack.c.bf16 %v2356, %v2355
    %v2378 = vpack.c.bf16 %v2358, %v2357
    %v2379 = vpack.c.bf16 %v2360, %v2359
    %v2380 = vpack.c.bf16 %v2362, %v2361
    %v2381 = vpack.c.bf16 %v2364, %v2363
    %v2382 = vpack.c.bf16 %v2366, %v2365
    %v2383 = vld [vmem:[#allocation8] sm:$0xf]
    %v2384 = vld [vmem:[#allocation8 + $0x4] sm:$0xf]
    %v2385 = vld [vmem:[#allocation8 + $0x8] sm:$0xf]
    %v2386 = vld [vmem:[#allocation8 + $0xc] sm:$0xf]
    %v2387 = vld [vmem:[#allocation8 + $0x10] sm:$0xf]
    %v2388 = vld [vmem:[#allocation8 + $0x14] sm:$0xf]
    %v2389 = vld [vmem:[#allocation8 + $0x18] sm:$0xf]
    %v2390 = vld [vmem:[#allocation8 + $0x1c] sm:$0xf]
    %v2391 = vld [vmem:[#allocation8 + $0x20] sm:$0xf]
    %v2392 = vld [vmem:[#allocation8 + $0x24] sm:$0xf]
    %v2393 = vld [vmem:[#allocation8 + $0x28] sm:$0xf]
    %v2394 = vld [vmem:[#allocation8 + $0x2c] sm:$0xf]
    %v2395 = vld [vmem:[#allocation8 + $0x30] sm:$0xf]
    %v2396 = vld [vmem:[#allocation8 + $0x34] sm:$0xf]
    %v2397 = vld [vmem:[#allocation8 + $0x38] sm:$0xf]
    %v2398 = vld [vmem:[#allocation8 + $0x3c] sm:$0xf]
    %v2399 = vld [vmem:[%s14] sm:$0x1]
    %v2401 = vlaneseq
    %v2402 = vshrl.u32 %v2401, 7
    %v2403 = vsub.s32 0, %v2402
    %v2404 = vrot.slane %v2399, %v2403
    %v2422 = vunpack.c.l.b16 %v2383
    %v2423 = vunpack.c.l.b16 %v2384
    %v2424 = vunpack.c.l.b16 %v2385
    %v2425 = vunpack.c.l.b16 %v2386
    %v2426 = vunpack.c.l.b16 %v2387
    %v2427 = vunpack.c.l.b16 %v2388
    %v2428 = vunpack.c.l.b16 %v2389
    %v2429 = vunpack.c.l.b16 %v2390
    %v2430 = vunpack.c.l.b16 %v2391
    %v2431 = vunpack.c.l.b16 %v2392
    %v2432 = vunpack.c.l.b16 %v2393
    %v2433 = vunpack.c.l.b16 %v2394
    %v2434 = vunpack.c.l.b16 %v2395
    %v2435 = vunpack.c.l.b16 %v2396
    %v2436 = vunpack.c.l.b16 %v2397
    %v2437 = vunpack.c.l.b16 %v2398
    %v2438 = vpack.c.b16 %v2423, %v2422
    %v2439 = vpack.c.b16 %v2425, %v2424
    %v2440 = vpack.c.b16 %v2427, %v2426
    %v2441 = vpack.c.b16 %v2429, %v2428
    %v2442 = vpack.c.b16 %v2431, %v2430
    %v2443 = vpack.c.b16 %v2433, %v2432
    %v2444 = vpack.c.b16 %v2435, %v2434
    %v2445 = vpack.c.b16 %v2437, %v2436
    %2454 = vmatprep.subr.bf16.mxu0 0
    %2455 = vmatpush1.bf16.msra.mxu0 %v2438
    %2456 = vmatprep.subr.bf16.mxu0 0
    %2457 = vmatpush1.bf16.msra.mxu0 %v2439
    %2458 = vmatprep.subr.bf16.mxu0 0
    %2459 = vmatpush1.bf16.msra.mxu0 %v2440
    %2460 = vmatprep.subr.bf16.mxu0 0
    %2461 = vmatpush1.bf16.msra.mxu0 %v2441
    %2462 = vmatprep.subr.bf16.mxu0 0
    %2463 = vmatpush1.bf16.msra.mxu0 %v2442
    %2464 = vmatprep.subr.bf16.mxu0 0
    %2465 = vmatpush1.bf16.msra.mxu0 %v2443
    %2466 = vmatprep.subr.bf16.mxu0 0
    %2467 = vmatpush1.bf16.msra.mxu0 %v2444
    %2468 = vmatprep.subr.bf16.mxu0 0
    %2469 = vmatpush1.bf16.msra.mxu0 %v2445
    %2470 = vmatprep.subr.bf16.mxu0 0
    %2471 = vmatpush1.bf16.msra.mxu0 0
    %2472 = vmatprep.subr.bf16.mxu0 0
    %2473 = vmatpush1.bf16.msra.mxu0 0
    %2474 = vmatprep.subr.bf16.mxu0 0
    %2475 = vmatpush1.bf16.msra.mxu0 0
    %2476 = vmatprep.subr.bf16.mxu0 0
    %2477 = vmatpush1.bf16.msra.mxu0 0
    %2478 = vmatprep.subr.bf16.mxu0 0
    %2479 = vmatpush1.bf16.msra.mxu0 0
    %2480 = vmatprep.subr.bf16.mxu0 0
    %2481 = vmatpush1.bf16.msra.mxu0 0
    %2482 = vmatprep.subr.bf16.mxu0 0
    %2483 = vmatpush1.bf16.msra.mxu0 0
    %2484 = vmatprep.subr.bf16.mxu0 0
    %2485 = vmatpush1.bf16.msra.mxu0 0
    %2486 = vmatprep.mubr.bf16.mxu0 0
    %2487 = vmatmul.mubr.bf16.gmra.mrb[0].mxu0 %v2367
    %v2488 = vpop.f32.mrb[0].mxu0
    %v2489 = vadd.f32 %v2404, %v2488
    %v2490 = vpop.f32.mrb[0].mxu0
    %v2491 = vpop.f32.mrb[0].mxu0
    %v2492 = vadd.f32 %v2404, %v2491
    %v2493 = vpop.f32.mrb[0].mxu0
    %2494 = vmatprep.mubr.bf16.mxu0 0
    %2495 = vmatmul.mubr.bf16.gmra.mrb[0].mxu0 %v2368
    %v2496 = vpop.f32.mrb[0].mxu0
    %v2497 = vadd.f32 %v2404, %v2496
    %v2498 = vpop.f32.mrb[0].mxu0
    %v2499 = vpop.f32.mrb[0].mxu0
    %v2500 = vadd.f32 %v2404, %v2499
    %v2501 = vpop.f32.mrb[0].mxu0
    %2502 = vmatprep.mubr.bf16.mxu0 0
    %2503 = vmatmul.mubr.bf16.gmra.mrb[0].mxu0 %v2369
    %v2504 = vpop.f32.mrb[0].mxu0
    %v2505 = vadd.f32 %v2404, %v2504
    %v2506 = vpop.f32.mrb[0].mxu0
    %v2507 = vpop.f32.mrb[0].mxu0
    %v2508 = vadd.f32 %v2404, %v2507
    %v2509 = vpop.f32.mrb[0].mxu0
    %2510 = vmatprep.mubr.bf16.mxu0 0
    %2511 = vmatmul.mubr.bf16.gmra.mrb[0].mxu0 %v2370
    %v2512 = vpop.f32.mrb[0].mxu0
    %v2513 = vadd.f32 %v2404, %v2512
    %v2514 = vpop.f32.mrb[0].mxu0
    %v2515 = vpop.f32.mrb[0].mxu0
    %v2516 = vadd.f32 %v2404, %v2515
    %v2517 = vpop.f32.mrb[0].mxu0
    %2518 = vmatprep.mubr.bf16.mxu0 0
    %2519 = vmatmul.mubr.bf16.gmra.mrb[0].mxu0 %v2371
    %v2520 = vpop.f32.mrb[0].mxu0
    %v2521 = vadd.f32 %v2404, %v2520
    %v2522 = vpop.f32.mrb[0].mxu0
    %v2523 = vpop.f32.mrb[0].mxu0
    %v2524 = vadd.f32 %v2404, %v2523
    %v2525 = vpop.f32.mrb[0].mxu0
    %2526 = vmatprep.mubr.bf16.mxu0 0
    %2527 = vmatmul.mubr.bf16.gmra.mrb[0].mxu0 %v2372
    %v2528 = vpop.f32.mrb[0].mxu0
    %v2529 = vadd.f32 %v2404, %v2528
    %v2530 = vpop.f32.mrb[0].mxu0
    %v2531 = vpop.f32.mrb[0].mxu0
    %v2532 = vadd.f32 %v2404, %v2531
    %v2533 = vpop.f32.mrb[0].mxu0
    %2534 = vmatprep.mubr.bf16.mxu0 0
    %2535 = vmatmul.mubr.bf16.gmra.mrb[0].mxu0 %v2373
    %v2536 = vpop.f32.mrb[0].mxu0
    %v2537 = vadd.f32 %v2404, %v2536
    %v2538 = vpop.f32.mrb[0].mxu0
    %v2539 = vpop.f32.mrb[0].mxu0
    %v2540 = vadd.f32 %v2404, %v2539
    %v2541 = vpop.f32.mrb[0].mxu0
    %2542 = vmatprep.mubr.bf16.mxu0 0
    %2543 = vmatmul.mubr.bf16.gmra.mrb[0].mxu0 %v2374
    %v2544 = vpop.f32.mrb[0].mxu0
    %v2545 = vadd.f32 %v2404, %v2544
    %v2546 = vpop.f32.mrb[0].mxu0
    %v2547 = vpop.f32.mrb[0].mxu0
    %v2548 = vadd.f32 %v2404, %v2547
    %v2549 = vpop.f32.mrb[0].mxu0
    %2550 = vmatprep.mubr.bf16.mxu0 0
    %2551 = vmatmul.mubr.bf16.gmra.mrb[0].mxu0 %v2375
    %v2552 = vpop.f32.mrb[0].mxu0
    %v2553 = vadd.f32 %v2404, %v2552
    %v2554 = vpop.f32.mrb[0].mxu0
    %v2555 = vpop.f32.mrb[0].mxu0
    %v2556 = vadd.f32 %v2404, %v2555
    %v2557 = vpop.f32.mrb[0].mxu0
    %2558 = vmatprep.mubr.bf16.mxu0 0
    %2559 = vmatmul.mubr.bf16.gmra.mrb[0].mxu0 %v2376
    %v2560 = vpop.f32.mrb[0].mxu0
    %v2561 = vadd.f32 %v2404, %v2560
    %v2562 = vpop.f32.mrb[0].mxu0
    %v2563 = vpop.f32.mrb[0].mxu0
    %v2564 = vadd.f32 %v2404, %v2563
    %v2565 = vpop.f32.mrb[0].mxu0
    %2566 = vmatprep.mubr.bf16.mxu0 0
    %2567 = vmatmul.mubr.bf16.gmra.mrb[0].mxu0 %v2377
    %v2568 = vpop.f32.mrb[0].mxu0
    %v2569 = vadd.f32 %v2404, %v2568
    %v2570 = vpop.f32.mrb[0].mxu0
    %v2571 = vpop.f32.mrb[0].mxu0
    %v2572 = vadd.f32 %v2404, %v2571
    %v2573 = vpop.f32.mrb[0].mxu0
    %2574 = vmatprep.mubr.bf16.mxu0 0
    %2575 = vmatmul.mubr.bf16.gmra.mrb[0].mxu0 %v2378
    %v2576 = vpop.f32.mrb[0].mxu0
    %v2577 = vadd.f32 %v2404, %v2576
    %v2578 = vpop.f32.mrb[0].mxu0
    %v2579 = vpop.f32.mrb[0].mxu0
    %v2580 = vadd.f32 %v2404, %v2579
    %v2581 = vpop.f32.mrb[0].mxu0
    %2582 = vmatprep.mubr.bf16.mxu0 0
    %2583 = vmatmul.mubr.bf16.gmra.mrb[0].mxu0 %v2379
    %v2584 = vpop.f32.mrb[0].mxu0
    %v2585 = vadd.f32 %v2404, %v2584
    %v2586 = vpop.f32.mrb[0].mxu0
    %v2587 = vpop.f32.mrb[0].mxu0
    %v2588 = vadd.f32 %v2404, %v2587
    %v2589 = vpop.f32.mrb[0].mxu0
    %2590 = vmatprep.mubr.bf16.mxu0 0
    %2591 = vmatmul.mubr.bf16.gmra.mrb[0].mxu0 %v2380
    %v2592 = vpop.f32.mrb[0].mxu0
    %v2593 = vadd.f32 %v2404, %v2592
    %v2594 = vpop.f32.mrb[0].mxu0
    %v2595 = vpop.f32.mrb[0].mxu0
    %v2596 = vadd.f32 %v2404, %v2595
    %v2597 = vpop.f32.mrb[0].mxu0
    %2598 = vmatprep.mubr.bf16.mxu0 0
    %2599 = vmatmul.mubr.bf16.gmra.mrb[0].mxu0 %v2381
    %v2600 = vpop.f32.mrb[0].mxu0
    %v2601 = vadd.f32 %v2404, %v2600
    %v2602 = vpop.f32.mrb[0].mxu0
    %v2603 = vpop.f32.mrb[0].mxu0
    %v2604 = vadd.f32 %v2404, %v2603
    %v2605 = vpop.f32.mrb[0].mxu0
    %2606 = vmatprep.mubr.bf16.mxu0 0
    %2607 = vmatmul.mubr.bf16.gmra.mrb[0].mxu0 %v2382
    %v2608 = vpop.f32.mrb[0].mxu0
    %v2609 = vadd.f32 %v2404, %v2608
    %v2610 = vpop.f32.mrb[0].mxu0
    %v2611 = vpop.f32.mrb[0].mxu0
    %v2612 = vadd.f32 %v2404, %v2611
    %v2613 = vpop.f32.mrb[0].mxu0
    %2614 = vdwg.mxu0
    %2615 = vst [vmem:[#allocation10] sm:$0xff] %v2489
    %2616 = vst [vmem:[#allocation10 + $0x8] sm:$0xff] %v2492
    %2617 = vst [vmem:[#allocation10 + $0x10] sm:$0xff] %v2497
    %2618 = vst [vmem:[#allocation10 + $0x18] sm:$0xff] %v2500
    %2619 = vst [vmem:[#allocation10 + $0x20] sm:$0xff] %v2505
    %2620 = vst [vmem:[#allocation10 + $0x28] sm:$0xff] %v2508
    %2621 = vst [vmem:[#allocation10 + $0x30] sm:$0xff] %v2513
    %2622 = vst [vmem:[#allocation10 + $0x38] sm:$0xff] %v2516
    %2623 = vst [vmem:[#allocation10 + $0x40] sm:$0xff] %v2521
    %2624 = vst [vmem:[#allocation10 + $0x48] sm:$0xff] %v2524
    %2625 = vst [vmem:[#allocation10 + $0x50] sm:$0xff] %v2529
    %2626 = vst [vmem:[#allocation10 + $0x58] sm:$0xff] %v2532
    %2627 = vst [vmem:[#allocation10 + $0x60] sm:$0xff] %v2537
    %2628 = vst [vmem:[#allocation10 + $0x68] sm:$0xff] %v2540
    %2629 = vst [vmem:[#allocation10 + $0x70] sm:$0xff] %v2545
    %2630 = vst [vmem:[#allocation10 + $0x78] sm:$0xff] %v2548
    %2631 = vst [vmem:[#allocation10 + $0x80] sm:$0xff] %v2553
    %2632 = vst [vmem:[#allocation10 + $0x88] sm:$0xff] %v2556
    %2633 = vst [vmem:[#allocation10 + $0x90] sm:$0xff] %v2561
    %2634 = vst [vmem:[#allocation10 + $0x98] sm:$0xff] %v2564
    %2635 = vst [vmem:[#allocation10 + $0xa0] sm:$0xff] %v2569
    %2636 = vst [vmem:[#allocation10 + $0xa8] sm:$0xff] %v2572
    %2637 = vst [vmem:[#allocation10 + $0xb0] sm:$0xff] %v2577
    %2638 = vst [vmem:[#allocation10 + $0xb8] sm:$0xff] %v2580
    %2639 = vst [vmem:[#allocation10 + $0xc0] sm:$0xff] %v2585
    %2640 = vst [vmem:[#allocation10 + $0xc8] sm:$0xff] %v2588
    %2641 = vst [vmem:[#allocation10 + $0xd0] sm:$0xff] %v2593
    %2642 = vst [vmem:[#allocation10 + $0xd8] sm:$0xff] %v2596
    %2643 = vst [vmem:[#allocation10 + $0xe0] sm:$0xff] %v2601
    %2644 = vst [vmem:[#allocation10 + $0xe8] sm:$0xff] %v2604
    %2645 = vst [vmem:[#allocation10 + $0xf0] sm:$0xff] %v2609
    %2646 = vst [vmem:[#allocation10 + $0xf8] sm:$0xff] %v2612
    // Predicated region
    $region78: #{tpu_custom_call.1} parent=1 // pred_check
      _
    $region79: #{tpu_custom_call.1} parent=1 // pred_check_branch
      %2648 = sbr.rel (0) target = $region81
    $region80: #{tpu_custom_call.1} parent=1 // pred_region
      %s2650 = ssub.s32 4096, 4096
      %2651 = vsyncadd [#allocation4], %s2650
      %s2652 = sshll.u32 [#allocation10], 4
      %s2653 = int_to_ptr.vmem [resolvable:$true] %s2652
      %2658 = dma.vmem_to_hbm [thread:$0]  %s2653, 4096, %s15, [#allocation4], 128, 128, 8
    $region81: #{tpu_custom_call.1} parent=1 // pred_fallthru
      _
    // Predicated region
    $region82: #{tpu_custom_call.1} parent=1 // pred_check
      _
    $region83: #{tpu_custom_call.1} parent=1 // pred_check_branch
      %2660 = sbr.rel (0) target = $region85
    $region84: #{tpu_custom_call.1} parent=1 // pred_region
      %2661 = dma.done [#allocation4], 4096
    $region85: #{tpu_custom_call.1} parent=1 // pred_fallthru
      _
    %2662 = vsyncpa [#allocation3], 1
    %2663 = vsyncpa [#allocation6], 1
    %2664 = vsyncpa [#allocation9], 1
    %2665 = vsyncpa [#allocation4], 1

</llo_original>
